<compile_context>
chip_gen: v6e
topology: v6e:2x2x1
jax: 0.10.0
libtpu: 0.0.40
codegen_flags: <defaults>
</compile_context>

<pallas_src>
import functools

import jax
import jax.numpy as jnp
from jax import lax
from jax.experimental import pallas as pl
from jax.experimental.pallas import tpu as pltpu

EPS = 1e-12


# --------------------------------------------------------------------------
# tiling helpers
# --------------------------------------------------------------------------
def _divisors(n):
    ds = set()
    i = 1
    while i * i <= n:
        if n % i == 0:
            ds.add(i)
            ds.add(n // i)
        i += 1
    return sorted(ds)


def _vmem_budget_bytes():
    """Per-generation VMEM budget: ~3/4 of physical capacity (96 MiB on
    v5e/v6e's 128 MiB, 48 MiB on v7x's 64 MiB); 48 MiB fallback."""
    try:
        cap = int(pltpu.get_tpu_info().vmem_capacity_bytes)
    except Exception:
        cap = 64 * 1024 * 1024
    return max(32 * 1024 * 1024, min(cap * 3 // 4, 112 * 1024 * 1024))


def _pick_stats_chunk(HW, Cin, xbytes, budget):
    """Flat spatial elements per stats tile: must divide H*W and be a multiple
    of 128 (lane tiling) unless it equals the full H*W."""
    limit = max(128, int(0.6 * budget) // max(1, 2 * Cin * xbytes))
    if HW % 128 == 0:
        cands = [d for d in _divisors(HW) if d % 128 == 0 and d <= limit]
        if cands:
            return max(cands)
    # TODO(synk): if H*W has no 128-multiple divisor within budget the whole
    # image becomes one tile; huge oddly-sized images could exceed VMEM here.
    return HW


def _pick_rc(bho):
    """Pooled rows handled per grid step (bounded static unroll)."""
    for rc in (32, 16, 8):
        if bho % rc == 0:
            return rc
    return bho  # only when bho == Ho and Ho has no multiple-of-8 divisor


def _pick_bho(Ho, Cin, Cout, W, Wo, xbytes, obytes, budget):
    """Pooled rows per input tile, chosen from the VMEM byte budget."""
    cands = [d for d in _divisors(Ho) if d % 8 == 0] or [Ho]
    resident = 2 * (2 * W * Wo + Cout * Cin + Cout) * 4  # pool, w_s, shift (x2 bufs)

    def fits(b):
        rc = _pick_rc(b)
        use = (2 * Cin * b * 2 * W * xbytes      # double-buffered input tile
               + 2 * Cout * rc * Wo * obytes     # double-buffered output tile
               + resident)
        return use <= int(0.75 * budget)

    good = [d for d in cands if fits(d)]
    return max(good) if good else min(cands)


# --------------------------------------------------------------------------
# pass 1: BN batch statistics (sum_x and Gram of x)
# --------------------------------------------------------------------------
def _stats_kernel(xf_ref, sumx_ref, gram_ref):
    @pl.when(jnp.logical_and(pl.program_id(0) == 0, pl.program_id(1) == 0))
    def _init():
        sumx_ref[...] = jnp.zeros_like(sumx_ref)
        gram_ref[...] = jnp.zeros_like(gram_ref)

    xf = xf_ref[0].astype(jnp.float32)                    # (Cin, Lb)
    sumx_ref[...] += jnp.sum(xf, axis=1, keepdims=True)   # (Cin, 1)
    gram_ref[...] += lax.dot_general(                     # (Cin, Cin) = x x^T
        xf, xf, (((1,), (1,)), ((), ())),
        preferred_element_type=jnp.float32)
    # TODO(synk): when Cout < Cin (or very large Cin in f32) accumulating
    # sum(y)/sum(y^2) of y = w@x per tile is cheaper than the Gram.


# --------------------------------------------------------------------------
# pass 2: fused 2x2-pool -> 1x1-conv (BN folded into w/shift), streamed
# --------------------------------------------------------------------------
def _transform_kernel(xq_ref, ws_ref, pool_ref, sh_ref, o_ref,
                      *, Cin, Cout, W, Wo, rc):
    r = pl.program_id(2)
    row0 = pl.multiple_of(r * rc, rc)
    # rc pooled rows sliced from the resident input tile: (Cin, rc, 2W)
    xc = xq_ref[0, :, pl.ds(row0, rc), :]
    xm = xc.reshape(Cin * rc, 2 * W).astype(jnp.float32)
    # 2x2 window sums for all rc rows with ONE MXU matmul
    pooled = jnp.dot(xm, pool_ref[...], preferred_element_type=jnp.float32)
    pooled = pooled.reshape(Cin, rc, Wo)                  # free leading split

    ws = ws_ref[...]                                      # BN scale + 0.25 folded in
    shb = jnp.broadcast_to(sh_ref[...], (Cout, Wo))       # hoisted once per step
    # TODO(synk): a single (Cout,Cin)x(Cin,rc,Wo) dot_general and a flat
    # (Cout, rc*Wo) lane-dense store would be better, but Mosaic does not
    # reliably lower rank-2 x rank-3 dot_general / minor-dim merges; the loop
    # below is bounded to rc <= 32 rows with only the Cin contraction inside.
    for rr in range(rc):
        y = lax.dot_general(ws, pooled[:, rr, :], (((1,), (0,)), ((), ())),
                            preferred_element_type=jnp.float32)
        o_ref[0, :, rr, :] = (y + shb).astype(o_ref.dtype)


# --------------------------------------------------------------------------
# wrapper
# --------------------------------------------------------------------------
def upsample_block2d(x, w_conv, gamma, beta, *, eps=EPS):
    """x: (N, Cin, H, W) NCHW; w_conv: (Cout, Cin, 1, 1); gamma/beta: (Cout,)."""
    N, Cin, H, W = x.shape
    Cout = w_conv.shape[0]
    # TODO(synk): only the module's default scale=(2,2) bilinear case (even
    # H, W; exact 2x downscale == 2x2 average pool) is implemented.
    assert H % 2 == 0 and W % 2 == 0, "even spatial dims required"
    Ho, Wo = H // 2, W // 2
    HW = H * W

    f32 = jnp.float32
    xbytes = jnp.dtype(x.dtype).itemsize
    budget = _vmem_budget_bytes()

    # ------------------ pass 1: BN batch statistics -------------------------
    Lb = _pick_stats_chunk(HW, Cin, xbytes, budget)
    x_flat = x.reshape(N, Cin, HW)                        # metadata-only view
    sum_x, gram = pl.pallas_call(
        _stats_kernel,
        out_shape=(jax.ShapeDtypeStruct((Cin, 1), f32),
                   jax.ShapeDtypeStruct((Cin, Cin), f32)),
        grid_spec=pltpu.PrefetchScalarGridSpec(
            num_scalar_prefetch=0,
            grid=(N, HW // Lb),
            in_specs=[pl.BlockSpec((1, Cin, Lb), lambda n, l: (n, 0, l))],
            out_specs=(pl.BlockSpec((Cin, 1), lambda n, l: (0, 0)),
                       pl.BlockSpec((Cin, Cin), lambda n, l: (0, 0))),
        ),
        compiler_params=pltpu.CompilerParams(
            # accumulation into resident outputs -> sequential grid
            dimension_semantics=("arbitrary", "arbitrary"),
            vmem_limit_bytes=budget,
        ),
    )(x_flat)

    # ---- fold BN (+ the 0.25 pool factor) into the conv weight / a shift ---
    n_total = float(N * HW)
    hi = jax.lax.Precision.HIGHEST
    w2 = w_conv[:, :, 0, 0].astype(f32)                           # (Cout, Cin)
    mean = jnp.dot(w2, sum_x, precision=hi) / n_total             # (Cout, 1)
    gw = jnp.dot(w2, gram, precision=hi)                          # (Cout, Cin)
    ey2 = jnp.sum(gw * w2, axis=1, keepdims=True) / n_total       # (Cout, 1)
    # TODO(synk): single-pass variance (E[y^2]-mean^2); a shifted two-pass
    # formulation is numerically safer when |mean| >> std at eps=1e-12.
    var = jnp.maximum(ey2 - mean * mean, 0.0)                     # biased var
    g2 = gamma.reshape(Cout, 1).astype(f32)
    b2 = beta.reshape(Cout, 1).astype(f32)
    ginv = g2 * lax.rsqrt(var + eps)
    w_s = w2 * (0.25 * ginv)                 # 0.25 = 2x2 average, folded into w
    shift = b2 - mean * ginv                                      # (Cout, 1)

    # ------------------ pass 2: pool -> conv -> affine ----------------------
    obytes = xbytes                          # output keeps the input dtype
    bho = _pick_bho(Ho, Cin, Cout, W, Wo, xbytes, obytes, budget)
    rc = _pick_rc(bho)
    HB, RB = Ho // bho, bho // rc

    x_quad = x.reshape(N, Cin, Ho, 2 * W)    # row-paired metadata-only view
    cols = (jnp.arange(W)[:, None] // 2 == jnp.arange(Wo)[None, :])
    pool = jnp.concatenate([cols, cols], axis=0).astype(f32)      # (2W, Wo)

    kernel = functools.partial(_transform_kernel,
                               Cin=Cin, Cout=Cout, W=W, Wo=Wo, rc=rc)
    out = pl.pallas_call(
        kernel,
        out_shape=jax.ShapeDtypeStruct((N, Cout, Ho, Wo), x.dtype),
        grid_spec=pltpu.PrefetchScalarGridSpec(
            num_scalar_prefetch=0,
            grid=(N, HB, RB),                # row-chunk axis walks a resident tile
            in_specs=[
                # big input tile: DMA'd once per (n, h), resident across RB steps
                pl.BlockSpec((1, Cin, bho, 2 * W), lambda n, h, r: (n, 0, h, 0)),
                # small operands stay VMEM-resident across the whole grid
                pl.BlockSpec((Cout, Cin), lambda n, h, r: (0, 0)),
                pl.BlockSpec((2 * W, Wo), lambda n, h, r: (0, 0)),
                pl.BlockSpec((Cout, 1), lambda n, h, r: (0, 0)),
            ],
            out_specs=pl.BlockSpec((1, Cout, rc, Wo),
                                   lambda n, h, r: (n, 0, h * RB + r, 0)),
        ),
        compiler_params=pltpu.CompilerParams(
            # (n, h) tiles are independent -> megacore-parallel on v7x;
            # the row-chunk axis reuses the resident tile so stays arbitrary.
            dimension_semantics=("parallel", "parallel", "arbitrary"),
            vmem_limit_bytes=budget,
        ),
    )(x_quad, w_s, pool, shift)
    # TODO(synk): writing pooled x to HBM in pass 1 and reading it here would
    # cut total x traffic from 2.0x to ~1.5x at the cost of an extra buffer.

    return out                               # NCHW: (N, Cout, Ho, Wo)


# --------------------------------------------------------------------------
# pure-JAX reference of the PyTorch forward (training-mode BN)
# --------------------------------------------------------------------------
def _reference(x, w_conv, gamma, beta, eps=EPS):
    y = jnp.einsum('nchw,oc->nohw', x.astype(jnp.float32),
                   w_conv[:, :, 0, 0].astype(jnp.float32),
                   precision=jax.lax.Precision.HIGHEST)
    mean = y.mean(axis=(0, 2, 3), keepdims=True)
    var = y.var(axis=(0, 2, 3), keepdims=True)            # biased variance
    yn = (y - mean) * jax.lax.rsqrt(var + eps)
    yn = yn * gamma.reshape(1, -1, 1, 1) + beta.reshape(1, -1, 1, 1)
    return 0.25 * (yn[:, :, 0::2, 0::2] + yn[:, :, 0::2, 1::2]
                   + yn[:, :, 1::2, 0::2] + yn[:, :, 1::2, 1::2])


if __name__ == "__main__":
    key = jax.random.PRNGKey(0)
    k_x, k_w, k_g, k_b = jax.random.split(key, 4)

    N, Cin, Cout, H, W = 2, 4, 8, 16, 16
    x = jax.random.normal(k_x, (N, Cin, H, W), dtype=jnp.float32)
    w_conv = 0.5 * jax.random.normal(k_w, (Cout, Cin, 1, 1), dtype=jnp.float32)
    gamma = 1.0 + 0.1 * jax.random.normal(k_g, (Cout,), dtype=jnp.float32)
    beta = 0.1 * jax.random.normal(k_b, (Cout,), dtype=jnp.float32)

    out = jax.block_until_ready(jax.jit(upsample_block2d)(x, w_conv, gamma, beta))
    ref = _reference(x, w_conv, gamma, beta)

    assert out.shape == (N, Cout, H // 2, W // 2), out.shape
    assert out.dtype == x.dtype, out.dtype
    err = float(jnp.max(jnp.abs(out - ref)))
    assert err < 2e-4, err
    print("KERNEL_OK")
</pallas_src>

<mosaic_0001>
module attributes {stable_mosaic.version = 11 : i64} {
  func.func @_stats_kernel(%arg0: i32, %arg1: i32, %arg2: memref<1x4x256xf32, #tpu.memory_space<vmem>>, %arg3: memref<4x1xf32, #tpu.memory_space<vmem>>, %arg4: memref<4x4xf32, #tpu.memory_space<vmem>>) attributes {dimension_semantics = [#tpu.dimension_semantics<arbitrary>, #tpu.dimension_semantics<arbitrary>], iteration_bounds = array<i64: 2, 1>, scalar_prefetch = 0 : i64, scratch_operands = 0 : i64, tpu.core_type = #tpu.core_type<tc>, window_params = [{transform_indices = @transform_0, window_bounds = array<i64: 1, 4, 256>}, {pipeline_mode = #tpu.pipeline_mode<synchronous>, transform_indices = @transform_1, window_bounds = array<i64: 4, 1>}, {pipeline_mode = #tpu.pipeline_mode<synchronous>, transform_indices = @transform_2, window_bounds = array<i64: 4, 4>}]} {
    %c0_i32 = arith.constant 0 : i32
    %0 = arith.cmpi eq, %arg0, %c0_i32 : i32
    %c0_i32_0 = arith.constant 0 : i32
    %1 = arith.cmpi eq, %arg1, %c0_i32_0 : i32
    %2 = arith.andi %0, %1 : i1
    %3 = arith.extui %2 : i1 to i32
    %c0_i32_1 = arith.constant 0 : i32
    %4 = arith.cmpi ne, %3, %c0_i32_1 : i32
    scf.if %4 {
      %cst_13 = arith.constant 0.000000e+00 : f32
      %16 = vector.broadcast %cst_13 : f32 to vector<4x1xf32>
      %c0_14 = arith.constant 0 : index
      %c0_15 = arith.constant 0 : index
      %17 = vector.load %arg3[%c0_14, %c0_15] : memref<4x1xf32, #tpu.memory_space<vmem>>, vector<4x1xf32>
      tpu.vector_store %arg3[%c0_14, %c0_15], %16 {strides = array<i32>} : memref<4x1xf32, #tpu.memory_space<vmem>>, vector<4x1xf32>,
      %cst_16 = arith.constant 0.000000e+00 : f32
      %18 = vector.broadcast %cst_16 : f32 to vector<4x4xf32>
      %c0_17 = arith.constant 0 : index
      %c0_18 = arith.constant 0 : index
      %19 = vector.load %arg4[%c0_17, %c0_18] : memref<4x4xf32, #tpu.memory_space<vmem>>, vector<4x4xf32>
      tpu.vector_store %arg4[%c0_17, %c0_18], %18 {strides = array<i32>} : memref<4x4xf32, #tpu.memory_space<vmem>>, vector<4x4xf32>,
    } else {
    }
    %c0 = arith.constant 0 : index
    %c0_2 = arith.constant 0 : index
    %c0_3 = arith.constant 0 : index
    %5 = vector.load %arg2[%c0, %c0_2, %c0_3] : memref<1x4x256xf32, #tpu.memory_space<vmem>>, vector<1x4x256xf32>
    %6 = vector.shape_cast %5 : vector<1x4x256xf32> to vector<4x256xf32>
    %c0_4 = arith.constant 0 : index
    %c0_5 = arith.constant 0 : index
    %7 = vector.load %arg3[%c0_4, %c0_5] : memref<4x1xf32, #tpu.memory_space<vmem>>, vector<4x1xf32>
    %cst = arith.constant dense<0.000000e+00> : vector<4xf32>
    %8 = vector.multi_reduction <add>, %6, %cst [1] : vector<4x256xf32> to vector<4xf32>
    %9 = vector.shape_cast %8 : vector<4xf32> to vector<4x1xf32>
    %10 = arith.addf %7, %9 : vector<4x1xf32>
    %c0_6 = arith.constant 0 : index
    %c0_7 = arith.constant 0 : index
    %11 = vector.load %arg3[%c0_6, %c0_7] : memref<4x1xf32, #tpu.memory_space<vmem>>, vector<4x1xf32>
    tpu.vector_store %arg3[%c0_6, %c0_7], %10 {strides = array<i32>} : memref<4x1xf32, #tpu.memory_space<vmem>>, vector<4x1xf32>,
    %c0_8 = arith.constant 0 : index
    %c0_9 = arith.constant 0 : index
    %12 = vector.load %arg4[%c0_8, %c0_9] : memref<4x4xf32, #tpu.memory_space<vmem>>, vector<4x4xf32>
    %cst_10 = arith.constant dense<0.000000e+00> : vector<4x4xf32>
    %13 = tpu.matmul %6, %6, %cst_10 {dimension_numbers = #tpu.dot_dimension_numbers<[1], [1], [0], [0], [0, 0, 1, 0], [], []>} : vector<4x256xf32>, vector<4x256xf32>, vector<4x4xf32> -> vector<4x4xf32>
    %14 = arith.addf %12, %13 : vector<4x4xf32>
    %c0_11 = arith.constant 0 : index
    %c0_12 = arith.constant 0 : index
    %15 = vector.load %arg4[%c0_11, %c0_12] : memref<4x4xf32, #tpu.memory_space<vmem>>, vector<4x4xf32>
    tpu.vector_store %arg4[%c0_11, %c0_12], %14 {strides = array<i32>} : memref<4x4xf32, #tpu.memory_space<vmem>>, vector<4x4xf32>,
    return
  }
  func.func @transform_0(%arg0: i32, %arg1: i32) -> (i32, i32, i32) {
    %c0_i32 = arith.constant 0 : i32
    %c0_i32_0 = arith.constant 0 : i32
    return %arg0, %c0_i32, %arg1 : i32, i32, i32
  }
  func.func @transform_1(%arg0: i32, %arg1: i32) -> (i32, i32) {
    %c0_i32 = arith.constant 0 : i32
    %c0_i32_0 = arith.constant 0 : i32
    %c0_i32_1 = arith.constant 0 : i32
    return %c0_i32, %c0_i32_0 : i32, i32
  }
  func.func @transform_2(%arg0: i32, %arg1: i32) -> (i32, i32) {
    %c0_i32 = arith.constant 0 : i32
    %c0_i32_0 = arith.constant 0 : i32
    %c0_i32_1 = arith.constant 0 : i32
    return %c0_i32, %c0_i32_0 : i32, i32
  }
}

module attributes {stable_mosaic.version = 11 : i64} {
  func.func @_transform_kernel(%arg0: i32, %arg1: i32, %arg2: i32, %arg3: memref<1x4x8x32xf32, #tpu.memory_space<vmem>>, %arg4: memref<8x4xf32, #tpu.memory_space<vmem>>, %arg5: memref<32x8xf32, #tpu.memory_space<vmem>>, %arg6: memref<8x1xf32, #tpu.memory_space<vmem>>, %arg7: memref<1x8x8x8xf32, #tpu.memory_space<vmem>>) attributes {dimension_semantics = [#tpu.dimension_semantics<parallel>, #tpu.dimension_semantics<parallel>, #tpu.dimension_semantics<arbitrary>], iteration_bounds = array<i64: 2, 1, 1>, scalar_prefetch = 0 : i64, scratch_operands = 0 : i64, tpu.core_type = #tpu.core_type<tc>, window_params = [{transform_indices = @transform_0, window_bounds = array<i64: 1, 4, 8, 32>}, {pipeline_mode = #tpu.pipeline_mode<synchronous>, transform_indices = @transform_1, window_bounds = array<i64: 8, 4>}, {pipeline_mode = #tpu.pipeline_mode<synchronous>, transform_indices = @transform_2, window_bounds = array<i64: 32, 8>}, {pipeline_mode = #tpu.pipeline_mode<synchronous>, transform_indices = @transform_3, window_bounds = array<i64: 8, 1>}, {transform_indices = @transform_4, window_bounds = array<i64: 1, 8, 8, 8>}]} {
    %c8_i32 = arith.constant 8 : i32
    %0 = arith.muli %arg2, %c8_i32 : i32
    %1 = tpu.assume_multiple %0, 8 : i32
    %c0 = arith.constant 0 : index
    %c0_0 = arith.constant 0 : index
    %2 = arith.index_cast %1 : i32 to index
    %c0_1 = arith.constant 0 : index
    %3 = vector.load %arg3[%c0, %c0_0, %2, %c0_1] : memref<1x4x8x32xf32, #tpu.memory_space<vmem>>, vector<1x4x8x32xf32>
    %4 = vector.shape_cast %3 : vector<1x4x8x32xf32> to vector<4x8x32xf32>
    %5 = vector.shape_cast %4 : vector<4x8x32xf32> to vector<32x32xf32>
    %c0_2 = arith.constant 0 : index
    %c0_3 = arith.constant 0 : index
    %6 = vector.load %arg5[%c0_2, %c0_3] : memref<32x8xf32, #tpu.memory_space<vmem>>, vector<32x8xf32>
    %cst = arith.constant dense<0.000000e+00> : vector<32x8xf32>
    %7 = tpu.matmul %5, %6, %cst {dimension_numbers = #tpu.dot_dimension_numbers<[1], [0], [0], [1], [0, 0, 1, 1], [], []>} : vector<32x32xf32>, vector<32x8xf32>, vector<32x8xf32> -> vector<32x8xf32>
    %8 = vector.shape_cast %7 : vector<32x8xf32> to vector<4x8x8xf32>
    %c0_4 = arith.constant 0 : index
    %c0_5 = arith.constant 0 : index
    %9 = vector.load %arg4[%c0_4, %c0_5] : memref<8x4xf32, #tpu.memory_space<vmem>>, vector<8x4xf32>
    %c0_6 = arith.constant 0 : index
    %c0_7 = arith.constant 0 : index
    %10 = vector.load %arg6[%c0_6, %c0_7] : memref<8x1xf32, #tpu.memory_space<vmem>>, vector<8x1xf32>
    %11 = vector.shape_cast %10 : vector<8x1xf32> to vector<8x1xf32>
    %12 = vector.broadcast %11 : vector<8x1xf32> to vector<8x8xf32>
    %13 = vector.extract_strided_slice %8 {offsets = [0, 0, 0], sizes = [4, 1, 8], strides = [1, 1, 1]} : vector<4x8x8xf32> to vector<4x1x8xf32>
    %14 = vector.shape_cast %13 : vector<4x1x8xf32> to vector<4x8xf32>
    %cst_8 = arith.constant dense<0.000000e+00> : vector<8x8xf32>
    %15 = tpu.matmul %9, %14, %cst_8 {dimension_numbers = #tpu.dot_dimension_numbers<[1], [0], [0], [1], [0, 0, 1, 1], [], []>} : vector<8x4xf32>, vector<4x8xf32>, vector<8x8xf32> -> vector<8x8xf32>
    %16 = arith.addf %15, %12 : vector<8x8xf32>
    %c0_9 = arith.constant 0 : index
    %c0_10 = arith.constant 0 : index
    %c0_11 = arith.constant 0 : index
    %c0_12 = arith.constant 0 : index
    %17 = vector.load %arg7[%c0_9, %c0_10, %c0_11, %c0_12] : memref<1x8x8x8xf32, #tpu.memory_space<vmem>>, vector<1x8x1x8xf32>
    %18 = vector.shape_cast %17 : vector<1x8x1x8xf32> to vector<8x8xf32>
    %19 = vector.shape_cast %16 : vector<8x8xf32> to vector<1x8x1x8xf32>
    tpu.vector_store %arg7[%c0_9, %c0_10, %c0_11, %c0_12], %19 {strides = array<i32>} : memref<1x8x8x8xf32, #tpu.memory_space<vmem>>, vector<1x8x1x8xf32>,
    %20 = vector.extract_strided_slice %8 {offsets = [0, 1, 0], sizes = [4, 1, 8], strides = [1, 1, 1]} : vector<4x8x8xf32> to vector<4x1x8xf32>
    %21 = vector.shape_cast %20 : vector<4x1x8xf32> to vector<4x8xf32>
    %cst_13 = arith.constant dense<0.000000e+00> : vector<8x8xf32>
    %22 = tpu.matmul %9, %21, %cst_13 {dimension_numbers = #tpu.dot_dimension_numbers<[1], [0], [0], [1], [0, 0, 1, 1], [], []>} : vector<8x4xf32>, vector<4x8xf32>, vector<8x8xf32> -> vector<8x8xf32>
    %23 = arith.addf %22, %12 : vector<8x8xf32>
    %c0_14 = arith.constant 0 : index
    %c0_15 = arith.constant 0 : index
    %c1 = arith.constant 1 : index
    %c0_16 = arith.constant 0 : index
    %24 = vector.load %arg7[%c0_14, %c0_15, %c1, %c0_16] : memref<1x8x8x8xf32, #tpu.memory_space<vmem>>, vector<1x8x1x8xf32>
    %25 = vector.shape_cast %24 : vector<1x8x1x8xf32> to vector<8x8xf32>
    %26 = vector.shape_cast %23 : vector<8x8xf32> to vector<1x8x1x8xf32>
    tpu.vector_store %arg7[%c0_14, %c0_15, %c1, %c0_16], %26 {strides = array<i32>} : memref<1x8x8x8xf32, #tpu.memory_space<vmem>>, vector<1x8x1x8xf32>,
    %27 = vector.extract_strided_slice %8 {offsets = [0, 2, 0], sizes = [4, 1, 8], strides = [1, 1, 1]} : vector<4x8x8xf32> to vector<4x1x8xf32>
    %28 = vector.shape_cast %27 : vector<4x1x8xf32> to vector<4x8xf32>
    %cst_17 = arith.constant dense<0.000000e+00> : vector<8x8xf32>
    %29 = tpu.matmul %9, %28, %cst_17 {dimension_numbers = #tpu.dot_dimension_numbers<[1], [0], [0], [1], [0, 0, 1, 1], [], []>} : vector<8x4xf32>, vector<4x8xf32>, vector<8x8xf32> -> vector<8x8xf32>
    %30 = arith.addf %29, %12 : vector<8x8xf32>
    %c0_18 = arith.constant 0 : index
    %c0_19 = arith.constant 0 : index
    %c2 = arith.constant 2 : index
    %c0_20 = arith.constant 0 : index
    %31 = vector.load %arg7[%c0_18, %c0_19, %c2, %c0_20] : memref<1x8x8x8xf32, #tpu.memory_space<vmem>>, vector<1x8x1x8xf32>
    %32 = vector.shape_cast %31 : vector<1x8x1x8xf32> to vector<8x8xf32>
    %33 = vector.shape_cast %30 : vector<8x8xf32> to vector<1x8x1x8xf32>
    tpu.vector_store %arg7[%c0_18, %c0_19, %c2, %c0_20], %33 {strides = array<i32>} : memref<1x8x8x8xf32, #tpu.memory_space<vmem>>, vector<1x8x1x8xf32>,
    %34 = vector.extract_strided_slice %8 {offsets = [0, 3, 0], sizes = [4, 1, 8], strides = [1, 1, 1]} : vector<4x8x8xf32> to vector<4x1x8xf32>
    %35 = vector.shape_cast %34 : vector<4x1x8xf32> to vector<4x8xf32>
    %cst_21 = arith.constant dense<0.000000e+00> : vector<8x8xf32>
    %36 = tpu.matmul %9, %35, %cst_21 {dimension_numbers = #tpu.dot_dimension_numbers<[1], [0], [0], [1], [0, 0, 1, 1], [], []>} : vector<8x4xf32>, vector<4x8xf32>, vector<8x8xf32> -> vector<8x8xf32>
    %37 = arith.addf %36, %12 : vector<8x8xf32>
    %c0_22 = arith.constant 0 : index
    %c0_23 = arith.constant 0 : index
    %c3 = arith.constant 3 : index
    %c0_24 = arith.constant 0 : index
    %38 = vector.load %arg7[%c0_22, %c0_23, %c3, %c0_24] : memref<1x8x8x8xf32, #tpu.memory_space<vmem>>, vector<1x8x1x8xf32>
    %39 = vector.shape_cast %38 : vector<1x8x1x8xf32> to vector<8x8xf32>
    %40 = vector.shape_cast %37 : vector<8x8xf32> to vector<1x8x1x8xf32>
    tpu.vector_store %arg7[%c0_22, %c0_23, %c3, %c0_24], %40 {strides = array<i32>} : memref<1x8x8x8xf32, #tpu.memory_space<vmem>>, vector<1x8x1x8xf32>,
    %41 = vector.extract_strided_slice %8 {offsets = [0, 4, 0], sizes = [4, 1, 8], strides = [1, 1, 1]} : vector<4x8x8xf32> to vector<4x1x8xf32>
    %42 = vector.shape_cast %41 : vector<4x1x8xf32> to vector<4x8xf32>
    %cst_25 = arith.constant dense<0.000000e+00> : vector<8x8xf32>
    %43 = tpu.matmul %9, %42, %cst_25 {dimension_numbers = #tpu.dot_dimension_numbers<[1], [0], [0], [1], [0, 0, 1, 1], [], []>} : vector<8x4xf32>, vector<4x8xf32>, vector<8x8xf32> -> vector<8x8xf32>
    %44 = arith.addf %43, %12 : vector<8x8xf32>
    %c0_26 = arith.constant 0 : index
    %c0_27 = arith.constant 0 : index
    %c4 = arith.constant 4 : index
    %c0_28 = arith.constant 0 : index
    %45 = vector.load %arg7[%c0_26, %c0_27, %c4, %c0_28] : memref<1x8x8x8xf32, #tpu.memory_space<vmem>>, vector<1x8x1x8xf32>
    %46 = vector.shape_cast %45 : vector<1x8x1x8xf32> to vector<8x8xf32>
    %47 = vector.shape_cast %44 : vector<8x8xf32> to vector<1x8x1x8xf32>
    tpu.vector_store %arg7[%c0_26, %c0_27, %c4, %c0_28], %47 {strides = array<i32>} : memref<1x8x8x8xf32, #tpu.memory_space<vmem>>, vector<1x8x1x8xf32>,
    %48 = vector.extract_strided_slice %8 {offsets = [0, 5, 0], sizes = [4, 1, 8], strides = [1, 1, 1]} : vector<4x8x8xf32> to vector<4x1x8xf32>
    %49 = vector.shape_cast %48 : vector<4x1x8xf32> to vector<4x8xf32>
    %cst_29 = arith.constant dense<0.000000e+00> : vector<8x8xf32>
    %50 = tpu.matmul %9, %49, %cst_29 {dimension_numbers = #tpu.dot_dimension_numbers<[1], [0], [0], [1], [0, 0, 1, 1], [], []>} : vector<8x4xf32>, vector<4x8xf32>, vector<8x8xf32> -> vector<8x8xf32>
    %51 = arith.addf %50, %12 : vector<8x8xf32>
    %c0_30 = arith.constant 0 : index
    %c0_31 = arith.constant 0 : index
    %c5 = arith.constant 5 : index
    %c0_32 = arith.constant 0 : index
    %52 = vector.load %arg7[%c0_30, %c0_31, %c5, %c0_32] : memref<1x8x8x8xf32, #tpu.memory_space<vmem>>, vector<1x8x1x8xf32>
    %53 = vector.shape_cast %52 : vector<1x8x1x8xf32> to vector<8x8xf32>
    %54 = vector.shape_cast %51 : vector<8x8xf32> to vector<1x8x1x8xf32>
    tpu.vector_store %arg7[%c0_30, %c0_31, %c5, %c0_32], %54 {strides = array<i32>} : memref<1x8x8x8xf32, #tpu.memory_space<vmem>>, vector<1x8x1x8xf32>,
    %55 = vector.extract_strided_slice %8 {offsets = [0, 6, 0], sizes = [4, 1, 8], strides = [1, 1, 1]} : vector<4x8x8xf32> to vector<4x1x8xf32>
    %56 = vector.shape_cast %55 : vector<4x1x8xf32> to vector<4x8xf32>
    %cst_33 = arith.constant dense<0.000000e+00> : vector<8x8xf32>
    %57 = tpu.matmul %9, %56, %cst_33 {dimension_numbers = #tpu.dot_dimension_numbers<[1], [0], [0], [1], [0, 0, 1, 1], [], []>} : vector<8x4xf32>, vector<4x8xf32>, vector<8x8xf32> -> vector<8x8xf32>
    %58 = arith.addf %57, %12 : vector<8x8xf32>
    %c0_34 = arith.constant 0 : index
    %c0_35 = arith.constant 0 : index
    %c6 = arith.constant 6 : index
    %c0_36 = arith.constant 0 : index
    %59 = vector.load %arg7[%c0_34, %c0_35, %c6, %c0_36] : memref<1x8x8x8xf32, #tpu.memory_space<vmem>>, vector<1x8x1x8xf32>
    %60 = vector.shape_cast %59 : vector<1x8x1x8xf32> to vector<8x8xf32>
    %61 = vector.shape_cast %58 : vector<8x8xf32> to vector<1x8x1x8xf32>
    tpu.vector_store %arg7[%c0_34, %c0_35, %c6, %c0_36], %61 {strides = array<i32>} : memref<1x8x8x8xf32, #tpu.memory_space<vmem>>, vector<1x8x1x8xf32>,
    %62 = vector.extract_strided_slice %8 {offsets = [0, 7, 0], sizes = [4, 1, 8], strides = [1, 1, 1]} : vector<4x8x8xf32> to vector<4x1x8xf32>
    %63 = vector.shape_cast %62 : vector<4x1x8xf32> to vector<4x8xf32>
    %cst_37 = arith.constant dense<0.000000e+00> : vector<8x8xf32>
    %64 = tpu.matmul %9, %63, %cst_37 {dimension_numbers = #tpu.dot_dimension_numbers<[1], [0], [0], [1], [0, 0, 1, 1], [], []>} : vector<8x4xf32>, vector<4x8xf32>, vector<8x8xf32> -> vector<8x8xf32>
    %65 = arith.addf %64, %12 : vector<8x8xf32>
    %c0_38 = arith.constant 0 : index
    %c0_39 = arith.constant 0 : index
    %c7 = arith.constant 7 : index
    %c0_40 = arith.constant 0 : index
    %66 = vector.load %arg7[%c0_38, %c0_39, %c7, %c0_40] : memref<1x8x8x8xf32, #tpu.memory_space<vmem>>, vector<1x8x1x8xf32>
    %67 = vector.shape_cast %66 : vector<1x8x1x8xf32> to vector<8x8xf32>
    %68 = vector.shape_cast %65 : vector<8x8xf32> to vector<1x8x1x8xf32>
    tpu.vector_store %arg7[%c0_38, %c0_39, %c7, %c0_40], %68 {strides = array<i32>} : memref<1x8x8x8xf32, #tpu.memory_space<vmem>>, vector<1x8x1x8xf32>,
    return
  }
  func.func @transform_0(%arg0: i32, %arg1: i32, %arg2: i32) -> (i32, i32, i32, i32) {
    %c0_i32 = arith.constant 0 : i32
    %c0_i32_0 = arith.constant 0 : i32
    %c0_i32_1 = arith.constant 0 : i32
    return %arg0, %c0_i32, %arg1, %c0_i32_0 : i32, i32, i32, i32
  }
  func.func @transform_1(%arg0: i32, %arg1: i32, %arg2: i32) -> (i32, i32) {
    %c0_i32 = arith.constant 0 : i32
    %c0_i32_0 = arith.constant 0 : i32
    %c0_i32_1 = arith.constant 0 : i32
    return %c0_i32, %c0_i32_0 : i32, i32
  }
  func.func @transform_2(%arg0: i32, %arg1: i32, %arg2: i32) -> (i32, i32) {
    %c0_i32 = arith.constant 0 : i32
    %c0_i32_0 = arith.constant 0 : i32
    %c0_i32_1 = arith.constant 0 : i32
    return %c0_i32, %c0_i32_0 : i32, i32
  }
  func.func @transform_3(%arg0: i32, %arg1: i32, %arg2: i32) -> (i32, i32) {
    %c0_i32 = arith.constant 0 : i32
    %c0_i32_0 = arith.constant 0 : i32
    %c0_i32_1 = arith.constant 0 : i32
    return %c0_i32, %c0_i32_0 : i32, i32
  }
  func.func @transform_4(%arg0: i32, %arg1: i32, %arg2: i32) -> (i32, i32, i32, i32) {
    %c1_i32 = arith.constant 1 : i32
    %0 = arith.muli %arg1, %c1_i32 : i32
    %1 = arith.addi %0, %arg2 : i32
    %c0_i32 = arith.constant 0 : i32
    %c0_i32_0 = arith.constant 0 : i32
    %c0_i32_1 = arith.constant 0 : i32
    return %arg0, %c0_i32, %1, %c0_i32_0 : i32, i32, i32, i32
  }
}

</mosaic_0001>

<llo_original>
// kernel: upsample_block2d.2
$region0: #{upsample_block2d.2}
  #allocation0 [shape = 'u32[]', space=smem, size = 0x4, offset = 0x4, fixed_abs, tag = 'smem constant byte address 0x4 - core index']
  #allocation1 [shape = 'u32[144,128]{1,0:T(1,128)}', space=vmem, size = 0x12000, scoped, tag = 'internal scratch']
  %s0 = inlined_call_operand.vmem [shape: f32[2,4,256], index: 0, kind: input, shape index: {}]
  %s1 = inlined_call_operand.vmem [shape: f32[4,1], index: 1, kind: output, shape index: {0}]
  %s2 = inlined_call_operand.vmem [shape: f32[4,4], index: 2, kind: output, shape index: {1}]
  %3 = xla_tuple %s1, %s2
  %s4 = sld [smem:[#allocation0]]
  $region49: #{upsample_block2d.2} parent=0
    _
  %s6 = ssub.s32 1, %s4
  %s7 = scalar_select 0, %s6, %s4
  loop: start=0, step=1, limit=4
  $region2: #{upsample_block2d.2} parent=0 // loop_pre_header
    _
  $region3: #{upsample_block2d.2} parent=0 // loop_header
    %s9 = sphi 0, %s13
    %p10 = scmp.ge.s32.totalorder %s9, 4
    %s16 = sphi 0, %s28
    %s17 = sphi 0, %s24
    %s18 = sphi 0, %s16
    %s19 = sphi 0, %s17
    %s20 = sphi 0, %s18
    %s21 = sphi 0, %s19
    %s33 = sphi 0, %s35
    %s36 = sphi 0, %s33
    %s37 = sphi 0, %s36
    %s53 = sphi 0, %s37
    %s57 = sphi 0, %s57
    %s59 = sphi 0, %s57
    %s60 = sphi 0, %s59
    %s74 = sphi 0, %s60
    %s78 = sphi 0, %s78
    %s80 = sphi 0, %s78
    %s81 = sphi 0, %s80
    %s95 = sphi 0, %s81
  $region4: #{upsample_block2d.2} parent=0 // loop_header_branch
    %12 = sbr.rel (%p10) target = $region8
  $region5: #{upsample_block2d.2} parent=0 // loop_body
    %s14 = ssub.s32 %s9, 1
    %s15 = ssub.s32 %s9, 2
    %s22 = sadd.s32 1, %s17
    %p23 = scmp.ge.s32.totalorder %s22, 1
    %s24 = scalar_select %p23, 0, %s22
    %s25 = sadd.s32 1, %s16
    %s26 = scalar_select %p23, %s25, %s16
    %p27 = scmp.ge.s32.totalorder %s26, 2
    %s28 = scalar_select %p27, 0, %s26
    %s29 = ssub.s32 %s16, %s28
    %s30 = ssub.s32 %s17, %s24
    %s31 = sor.u32 %s29, %s30
    %p32 = scmp.eq.s32.totalorder %s31, 0
    %s34 = sadd.s32 %s33, 1
    %s35 = scalar_select %p32, %s33, %s34
    %p38 = pneg %p32
    %p39 = scmp.eq.s32.totalorder %s9, 1
    %p40 = por %p38, %p39
    %p41 = scmp.ne.s32.totalorder %s33, %s36
    %p42 = scmp.eq.s32.totalorder %s9, 0
    %p43 = por %p41, %p42
    %p44 = scmp.ne.s32.totalorder %s33, %s36
    %p45 = scmp.eq.s32.totalorder %s14, 1
    %p46 = por %p44, %p45
    %p47 = scmp.ne.s32.totalorder %s36, %s37
    %p48 = scmp.eq.s32.totalorder %s14, 0
    %p49 = por %p47, %p48
    %p50 = scmp.ne.s32.totalorder %s36, %s37
    %p51 = scmp.eq.s32.totalorder %s15, 1
    %p52 = por %p50, %p51
    %p54 = scmp.ne.s32.totalorder %s37, %s53
    %p55 = scmp.eq.s32.totalorder %s15, 0
    %p56 = por %p54, %p55
    %s58 = sadd.s32 %s57, 1
    %p61 = scmp.eq.s32.totalorder %s9, 1
    %p62 = scmp.ne.s32.totalorder %s57, %s59
    %p63 = scmp.eq.s32.totalorder %s9, 0
    %p64 = por %p62, %p63
    %p65 = scmp.ne.s32.totalorder %s57, %s59
    %p66 = scmp.eq.s32.totalorder %s14, 1
    %p67 = por %p65, %p66
    %p68 = scmp.ne.s32.totalorder %s59, %s60
    %p69 = scmp.eq.s32.totalorder %s14, 0
    %p70 = por %p68, %p69
    %p71 = scmp.ne.s32.totalorder %s59, %s60
    %p72 = scmp.eq.s32.totalorder %s15, 1
    %p73 = por %p71, %p72
    %p75 = scmp.ne.s32.totalorder %s60, %s74
    %p76 = scmp.eq.s32.totalorder %s15, 0
    %p77 = por %p75, %p76
    %s79 = sadd.s32 %s78, 1
    %p82 = scmp.eq.s32.totalorder %s9, 1
    %p83 = scmp.ne.s32.totalorder %s78, %s80
    %p84 = scmp.eq.s32.totalorder %s9, 0
    %p85 = por %p83, %p84
    %p86 = scmp.ne.s32.totalorder %s78, %s80
    %p87 = scmp.eq.s32.totalorder %s14, 1
    %p88 = por %p86, %p87
    %p89 = scmp.ne.s32.totalorder %s80, %s81
    %p90 = scmp.eq.s32.totalorder %s14, 0
    %p91 = por %p89, %p90
    %p92 = scmp.ne.s32.totalorder %s80, %s81
    %p93 = scmp.eq.s32.totalorder %s15, 1
    %p94 = por %p92, %p93
    %p96 = scmp.ne.s32.totalorder %s81, %s95
    %p97 = scmp.eq.s32.totalorder %s15, 0
    %p98 = por %p96, %p97
    %p99 = scmp.le.s32.totalorder 1, %s9
    %p100 = scmp.lt.s32.totalorder %s9, 3
    %p101 = pnand %p99, %p100
    %p102 = pneg %p101
    // Predicated region
    $region9: #{upsample_block2d.2} parent=5 // pred_check
      _
    $region10: #{upsample_block2d.2} parent=5 // pred_check_branch
      %104 = sbr.rel (%p101) target = $region12
    $region11: #{upsample_block2d.2} parent=5 // pred_region
      %s105 = ssub.s32 %s9, 1
    $region12: #{upsample_block2d.2} parent=5 // pred_fallthru
      _
    %p106 = scmp.lt.s32.totalorder %s9, 2
    // Predicated region
    $region13: #{upsample_block2d.2} parent=5 // pred_check
      %p107 = pneg %p106
    $region14: #{upsample_block2d.2} parent=5 // pred_check_branch
      %109 = sbr.rel (%p107) target = $region16
    $region15: #{upsample_block2d.2} parent=5 // pred_region
      // Predicated region
      $region17: #{upsample_block2d.2} parent=15 // pred_check
        %p110 = pneg %p43
      $region18: #{upsample_block2d.2} parent=15 // pred_check_branch
        %112 = sbr.rel (%p110) target = $region20
      $region19: #{upsample_block2d.2} parent=15 // pred_region
        %s113 = smul.u32 2, %s17
        %p114 = scmp.lt.s32.totalorder %s16, 1
        %s115 = scalar_select %p114, %s16, 1
        %p116 = scmp.lt.s32.totalorder %s113, 1
        %s117 = scalar_select %p116, %s113, 1
        %s118 = smul.addr %s115, 2
        %s119 = sadd.s32 %s117, %s118
        %s120 = smul.addr %s119, 4
        %s121 = scalar_lea.vmem %s0, %s120
        %s122 = smul.u32 2, %s17
      $region20: #{upsample_block2d.2} parent=15 // pred_fallthru
        _
    $region16: #{upsample_block2d.2} parent=5 // pred_fallthru
      _
    %p123 = scmp.le.s32.totalorder 1, %s9
    %p124 = scmp.lt.s32.totalorder %s9, 3
    %p125 = pnand %p123, %p124
    %p126 = pneg %p125
    // Predicated region
    $region21: #{upsample_block2d.2} parent=5 // pred_check
      _
    $region22: #{upsample_block2d.2} parent=5 // pred_check_branch
      %128 = sbr.rel (%p125) target = $region24
    $region23: #{upsample_block2d.2} parent=5 // pred_region
      %s129 = ssub.s32 %s9, 1
      %s130 = smul.u32 2, %s19
      %p131 = scmp.lt.s32.totalorder %s18, 1
      %s132 = scalar_select %p131, %s18, 1
      %p133 = scmp.lt.s32.totalorder %s130, 1
      %s134 = scalar_select %p133, %s130, 1
      %s135 = smul.addr %s132, 2
      %s136 = sadd.s32 %s134, %s135
      %s137 = smul.addr %s136, 4
      %s138 = scalar_lea.vmem %s0, %s137
      %p139 = pneg %p49
      %p140 = pneg %p46
      %p141 = pneg %p70
      %p142 = pneg %p67
      %p143 = pneg %p91
      %p144 = pneg %p88
      %s145 = smul.u32 2, %s19
      %p146 = scmp.lt.s32.totalorder %s18, 1
      %s147 = scalar_select %p146, %s18, 1
      %p148 = scmp.lt.s32.totalorder %s145, 1
      %s149 = scalar_select %p148, %s145, 1
      %s150 = smul.addr %s147, 2
      %s151 = sadd.s32 %s149, %s150
      %s152 = smul.addr %s151, 4
      %s153 = scalar_lea.vmem %s0, %s152
      %s154 = smul.u32 2, %s19
      %p155 = scmp.eq.s32.totalorder %s18, 0
      %p156 = scmp.eq.s32.totalorder %s19, 0
      %p157 = pnand %p155, %p156
      %p158 = pneg %p157
      // Predicated region
      $region25: #{upsample_block2d.2} parent=23 // pred_check
        _
      $region26: #{upsample_block2d.2} parent=23 // pred_check_branch
        %160 = sbr.rel (%p157) target = $region28
      $region27: #{upsample_block2d.2} parent=23 // pred_region
        %vm161 = vcmask 3072
        %162 = vst.msk [vmem:[%s1] sm:$0xf] %vm161, 0.0
        %vm163 = vcmask 27648
        %164 = vst.msk [vmem:[%s2] sm:$0xf] %vm163, 0.0
      $region28: #{upsample_block2d.2} parent=23 // pred_fallthru
        _
      %v165 = vld [vmem:[%s153] sm:$0xff]
      %v166 = vld [vmem:[%s1] sm:$0xf]
      %v168 = vcombine.high %v165, %v165
      %vm170 = vcmask 1043456
      %v171 = vsel %vm170, %v165, 0.0
      %v172 = vsel %vm170, %v168, 0.0
      %v173 = vadd.f32 %v171, %v172
      %174 = vadd.xlane.f32.xlu0 %v173
      %v175 = vpop.xlane.xlu0 %174
      %v176 = vadd.f32 %v166, %v175
      %vm177 = vcmask 3072
      %178 = vst.msk [vmem:[%s1] sm:$0xf] %vm177, %v176
      %v179 = vld [vmem:[%s2] sm:$0xf]
      %180 = vmatprep.subr.mxu0 0.0
      %181 = vmatpush1.xpose.msra.mxu0 0.0
      %182 = vmatprep.subr.mxu0 0.0
      %183 = vmatpush1.xpose.msra.mxu0 0.0
      %184 = vmatprep.subr.mxu0 0.0
      %185 = vmatpush1.xpose.msra.mxu0 0.0
      %186 = vmatprep.subr.mxu0 0.0
      %187 = vmatpush1.xpose.msra.mxu0 0.0
      %188 = vmatprep.subr.mxu0 0.0
      %189 = vmatpush1.xpose.msra.mxu0 0.0
      %190 = vmatprep.subr.mxu0 0.0
      %191 = vmatpush1.xpose.msra.mxu0 0.0
      %192 = vmatprep.subr.mxu0 0.0
      %193 = vmatpush1.xpose.msra.mxu0 0.0
      %194 = vmatprep.subr.mxu0 0.0
      %195 = vmatpush1.xpose.msra.mxu0 0.0
      %196 = vmatprep.subr.mxu0 0.0
      %197 = vmatpush1.xpose.msra.mxu0 0.0
      %198 = vmatprep.subr.mxu0 0.0
      %199 = vmatpush1.xpose.msra.mxu0 0.0
      %200 = vmatprep.subr.mxu0 0.0
      %201 = vmatpush1.xpose.msra.mxu0 0.0
      %202 = vmatprep.subr.mxu0 0.0
      %203 = vmatpush1.xpose.msra.mxu0 0.0
      %204 = vmatprep.subr.mxu0 0.0
      %205 = vmatpush1.xpose.msra.mxu0 0.0
      %206 = vmatprep.subr.mxu0 0.0
      %207 = vmatpush1.xpose.msra.mxu0 0.0
      %208 = vmatprep.subr.mxu0 0.0
      %209 = vmatpush1.xpose.msra.mxu0 0.0
      %210 = vmatprep.subr.mxu0 %v168
      %211 = vmatpush1.xpose.msra.mxu0 %v165
      %212 = vmatprep.subr.mxu0 0.0
      %213 = vmatpush2.xpose.msra.mxu0 0.0
      %214 = vmatprep.subr.mxu0 0.0
      %215 = vmatpush2.xpose.msra.mxu0 0.0
      %216 = vmatprep.subr.mxu0 0.0
      %217 = vmatpush2.xpose.msra.mxu0 0.0
      %218 = vmatprep.subr.mxu0 0.0
      %219 = vmatpush2.xpose.msra.mxu0 0.0
      %220 = vmatprep.subr.mxu0 0.0
      %221 = vmatpush2.xpose.msra.mxu0 0.0
      %222 = vmatprep.subr.mxu0 0.0
      %223 = vmatpush2.xpose.msra.mxu0 0.0
      %224 = vmatprep.subr.mxu0 0.0
      %225 = vmatpush2.xpose.msra.mxu0 0.0
      %226 = vmatprep.subr.mxu0 0.0
      %227 = vmatpush2.xpose.msra.mxu0 0.0
      %228 = vmatprep.subr.mxu0 0.0
      %229 = vmatpush2.xpose.msra.mxu0 0.0
      %230 = vmatprep.subr.mxu0 0.0
      %231 = vmatpush2.xpose.msra.mxu0 0.0
      %232 = vmatprep.subr.mxu0 0.0
      %233 = vmatpush2.xpose.msra.mxu0 0.0
      %234 = vmatprep.subr.mxu0 0.0
      %235 = vmatpush2.xpose.msra.mxu0 0.0
      %236 = vmatprep.subr.mxu0 0.0
      %237 = vmatpush2.xpose.msra.mxu0 0.0
      %238 = vmatprep.subr.mxu0 0.0
      %239 = vmatpush2.xpose.msra.mxu0 0.0
      %240 = vmatprep.subr.mxu0 0.0
      %241 = vmatpush2.xpose.msra.mxu0 0.0
      %242 = vmatprep.subr.mxu0 0.0
      %243 = vmatpush2.xpose.msra.mxu0 0.0
      %244 = vmatprep.mubr.f32.mxu0 %v168
      %245 = vmatmul.mubr.f32.gmra.mxu0 %v165
      %v246 = vpop.f32.mrf.mxu0
      %v247 = vadd.f32 0.0, %v246
      %v248 = vpop.f32.mrf.mxu0
      %249 = vdwg.mxu0
      %v250 = vadd.f32 %v179, %v247
      %vm251 = vcmask 27648
      %252 = vst.msk [vmem:[%s2] sm:$0xf] %vm251, %v250
      // Predicated region
      $region29: #{upsample_block2d.2} parent=23 // pred_check
        %p253 = pneg %p67
      $region30: #{upsample_block2d.2} parent=23 // pred_check_branch
        %255 = sbr.rel (%p253) target = $region32
      $region31: #{upsample_block2d.2} parent=23 // pred_region
        _
      $region32: #{upsample_block2d.2} parent=23 // pred_fallthru
        _
      // Predicated region
      $region33: #{upsample_block2d.2} parent=23 // pred_check
        %p256 = pneg %p88
      $region34: #{upsample_block2d.2} parent=23 // pred_check_branch
        %258 = sbr.rel (%p256) target = $region36
      $region35: #{upsample_block2d.2} parent=23 // pred_region
        _
      $region36: #{upsample_block2d.2} parent=23 // pred_fallthru
        _
      // Predicated region
      $region37: #{upsample_block2d.2} parent=23 // pred_check
        %p259 = pneg %p67
      $region38: #{upsample_block2d.2} parent=23 // pred_check_branch
        %261 = sbr.rel (%p259) target = $region40
      $region39: #{upsample_block2d.2} parent=23 // pred_region
        _
      $region40: #{upsample_block2d.2} parent=23 // pred_fallthru
        _
      // Predicated region
      $region41: #{upsample_block2d.2} parent=23 // pred_check
        %p262 = pneg %p88
      $region42: #{upsample_block2d.2} parent=23 // pred_check_branch
        %264 = sbr.rel (%p262) target = $region44
      $region43: #{upsample_block2d.2} parent=23 // pred_region
        _
      $region44: #{upsample_block2d.2} parent=23 // pred_fallthru
        _
    $region24: #{upsample_block2d.2} parent=5 // pred_fallthru
      _
    %p265 = scmp.le.s32.totalorder 2, %s9
    // Predicated region
    $region45: #{upsample_block2d.2} parent=5 // pred_check
      %p266 = pneg %p265
    $region46: #{upsample_block2d.2} parent=5 // pred_check_branch
      %268 = sbr.rel (%p266) target = $region48
    $region47: #{upsample_block2d.2} parent=5 // pred_region
      %s269 = ssub.s32 %s9, 2
    $region48: #{upsample_block2d.2} parent=5 // pred_fallthru
      _
  $region6: #{upsample_block2d.2} parent=0 // loop_footer
    %s13 = sadd.s32 1, %s9
  $region7: #{upsample_block2d.2} parent=0 // loop_footer_branch
    %8 = sbr.rel target = $region3
  $region8: #{upsample_block2d.2} parent=0 // loop_exit
    _

// kernel: upsample_block2d.3
$region0: #{upsample_block2d.3}
  #allocation0 [shape = 'u32[]', space=smem, size = 0x4, offset = 0x4, fixed_abs, tag = 'smem constant byte address 0x4 - core index']
  #allocation1 [shape = 'u32[144,128]{1,0:T(1,128)}', space=vmem, size = 0x12000, scoped, tag = 'internal scratch']
  %s0 = inlined_call_operand.vmem [shape: f32[2,4,8,32], index: 0, kind: input, shape index: {}]
  %s1 = inlined_call_operand.vmem [shape: f32[8,4], index: 1, kind: input, shape index: {}]
  %s2 = inlined_call_operand.vmem [shape: f32[32,8], index: 2, kind: input, shape index: {}]
  %s3 = inlined_call_operand.vmem [shape: f32[8,1], index: 3, kind: input, shape index: {}]
  %s4 = inlined_call_operand.hbm [shape: f32[2,8,8,8], index: 4, kind: output, shape index: {}]
  %s5 = sld [smem:[#allocation0]]
  $region49: #{upsample_block2d.3} parent=0
    _
  %s7 = ssub.s32 1, %s5
  %s8 = scalar_select 0, %s7, %s5
  $region1: #{upsample_block2d.3} parent=0
    #allocation2 [shape = 'u8[65536]{0}', space=vmem, size = 0x10000, scoped, tag = 'output window, operand 0']
    #allocation3 [shape = 's32[2]{0}', space=sflag, size = 0x8, scoped, tag = 'scoped memory for upsample_block2d.3']
    %9 = vsyncpa [#allocation3], 0
    %s10 = scalar_lea.sflag [#allocation3], 1
    %11 = vsyncpa %s10, 0
    loop: start=0, step=1, limit=4
    $region2: #{upsample_block2d.3} parent=1 // loop_pre_header
      _
    $region3: #{upsample_block2d.3} parent=1 // loop_header
      %s13 = sphi 0, %s17
      %p14 = scmp.ge.s32.totalorder %s13, 4
      %s20 = sphi 0, %s39
      %s21 = sphi 0, %s35
      %s22 = sphi 0, %s31
      %s23 = sphi 0, %s20
      %s24 = sphi 0, %s21
      %s25 = sphi 0, %s22
      %s26 = sphi 0, %s23
      %s27 = sphi 0, %s24
      %s28 = sphi 0, %s25
      %s44 = sphi 0, %s46
      %s47 = sphi 0, %s44
      %s48 = sphi 0, %s47
      %s64 = sphi 0, %s48
      %s68 = sphi 0, %s68
      %s70 = sphi 0, %s68
      %s71 = sphi 0, %s70
      %s85 = sphi 0, %s71
      %s89 = sphi 0, %s89
      %s91 = sphi 0, %s89
      %s92 = sphi 0, %s91
      %s106 = sphi 0, %s92
      %s110 = sphi 0, %s110
      %s112 = sphi 0, %s110
      %s113 = sphi 0, %s112
      %s127 = sphi 0, %s113
      %s137 = sphi 0, %s139
      %s140 = sphi 0, %s137
      %s141 = sphi 0, %s140
      %s157 = sphi 0, %s141
    $region4: #{upsample_block2d.3} parent=1 // loop_header_branch
      %16 = sbr.rel (%p14) target = $region8
    $region5: #{upsample_block2d.3} parent=1 // loop_body
      %s18 = ssub.s32 %s13, 1
      %s19 = ssub.s32 %s13, 2
      %s29 = sadd.s32 1, %s22
      %p30 = scmp.ge.s32.totalorder %s29, 1
      %s31 = scalar_select %p30, 0, %s29
      %s32 = sadd.s32 1, %s21
      %s33 = scalar_select %p30, %s32, %s21
      %p34 = scmp.ge.s32.totalorder %s33, 1
      %s35 = scalar_select %p34, 0, %s33
      %s36 = sadd.s32 1, %s20
      %s37 = scalar_select %p34, %s36, %s20
      %p38 = scmp.ge.s32.totalorder %s37, 2
      %s39 = scalar_select %p38, 0, %s37
      %s40 = ssub.s32 %s20, %s39
      %s41 = ssub.s32 %s21, %s35
      %s42 = sor.u32 %s40, %s41
      %p43 = scmp.eq.s32.totalorder %s42, 0
      %s45 = sadd.s32 %s44, 1
      %s46 = scalar_select %p43, %s44, %s45
      %p49 = pneg %p43
      %p50 = scmp.eq.s32.totalorder %s13, 1
      %p51 = por %p49, %p50
      %p52 = scmp.ne.s32.totalorder %s44, %s47
      %p53 = scmp.eq.s32.totalorder %s13, 0
      %p54 = por %p52, %p53
      %p55 = scmp.ne.s32.totalorder %s44, %s47
      %p56 = scmp.eq.s32.totalorder %s18, 1
      %p57 = por %p55, %p56
      %p58 = scmp.ne.s32.totalorder %s47, %s48
      %p59 = scmp.eq.s32.totalorder %s18, 0
      %p60 = por %p58, %p59
      %p61 = scmp.ne.s32.totalorder %s47, %s48
      %p62 = scmp.eq.s32.totalorder %s19, 1
      %p63 = por %p61, %p62
      %p65 = scmp.ne.s32.totalorder %s48, %s64
      %p66 = scmp.eq.s32.totalorder %s19, 0
      %p67 = por %p65, %p66
      %s69 = sadd.s32 %s68, 1
      %p72 = scmp.eq.s32.totalorder %s13, 1
      %p73 = scmp.ne.s32.totalorder %s68, %s70
      %p74 = scmp.eq.s32.totalorder %s13, 0
      %p75 = por %p73, %p74
      %p76 = scmp.ne.s32.totalorder %s68, %s70
      %p77 = scmp.eq.s32.totalorder %s18, 1
      %p78 = por %p76, %p77
      %p79 = scmp.ne.s32.totalorder %s70, %s71
      %p80 = scmp.eq.s32.totalorder %s18, 0
      %p81 = por %p79, %p80
      %p82 = scmp.ne.s32.totalorder %s70, %s71
      %p83 = scmp.eq.s32.totalorder %s19, 1
      %p84 = por %p82, %p83
      %p86 = scmp.ne.s32.totalorder %s71, %s85
      %p87 = scmp.eq.s32.totalorder %s19, 0
      %p88 = por %p86, %p87
      %s90 = sadd.s32 %s89, 1
      %p93 = scmp.eq.s32.totalorder %s13, 1
      %p94 = scmp.ne.s32.totalorder %s89, %s91
      %p95 = scmp.eq.s32.totalorder %s13, 0
      %p96 = por %p94, %p95
      %p97 = scmp.ne.s32.totalorder %s89, %s91
      %p98 = scmp.eq.s32.totalorder %s18, 1
      %p99 = por %p97, %p98
      %p100 = scmp.ne.s32.totalorder %s91, %s92
      %p101 = scmp.eq.s32.totalorder %s18, 0
      %p102 = por %p100, %p101
      %p103 = scmp.ne.s32.totalorder %s91, %s92
      %p104 = scmp.eq.s32.totalorder %s19, 1
      %p105 = por %p103, %p104
      %p107 = scmp.ne.s32.totalorder %s92, %s106
      %p108 = scmp.eq.s32.totalorder %s19, 0
      %p109 = por %p107, %p108
      %s111 = sadd.s32 %s110, 1
      %p114 = scmp.eq.s32.totalorder %s13, 1
      %p115 = scmp.ne.s32.totalorder %s110, %s112
      %p116 = scmp.eq.s32.totalorder %s13, 0
      %p117 = por %p115, %p116
      %p118 = scmp.ne.s32.totalorder %s110, %s112
      %p119 = scmp.eq.s32.totalorder %s18, 1
      %p120 = por %p118, %p119
      %p121 = scmp.ne.s32.totalorder %s112, %s113
      %p122 = scmp.eq.s32.totalorder %s18, 0
      %p123 = por %p121, %p122
      %p124 = scmp.ne.s32.totalorder %s112, %s113
      %p125 = scmp.eq.s32.totalorder %s19, 1
      %p126 = por %p124, %p125
      %p128 = scmp.ne.s32.totalorder %s113, %s127
      %p129 = scmp.eq.s32.totalorder %s19, 0
      %p130 = por %p128, %p129
      %s131 = sadd.s32 %s21, %s22
      %s132 = sadd.s32 %s35, %s31
      %s133 = ssub.s32 %s20, %s39
      %s134 = ssub.s32 %s131, %s132
      %s135 = sor.u32 %s133, %s134
      %p136 = scmp.eq.s32.totalorder %s135, 0
      %s138 = sadd.s32 %s137, 1
      %s139 = scalar_select %p136, %s137, %s138
      %p142 = pneg %p136
      %p143 = scmp.eq.s32.totalorder %s13, 1
      %p144 = por %p142, %p143
      %p145 = scmp.ne.s32.totalorder %s137, %s140
      %p146 = scmp.eq.s32.totalorder %s13, 0
      %p147 = por %p145, %p146
      %p148 = scmp.ne.s32.totalorder %s137, %s140
      %p149 = scmp.eq.s32.totalorder %s18, 1
      %p150 = por %p148, %p149
      %p151 = scmp.ne.s32.totalorder %s140, %s141
      %p152 = scmp.eq.s32.totalorder %s18, 0
      %p153 = por %p151, %p152
      %p154 = scmp.ne.s32.totalorder %s140, %s141
      %p155 = scmp.eq.s32.totalorder %s19, 1
      %p156 = por %p154, %p155
      %p158 = scmp.ne.s32.totalorder %s141, %s157
      %p159 = scmp.eq.s32.totalorder %s19, 0
      %p160 = por %p158, %p159
      %p161 = scmp.le.s32.totalorder 1, %s13
      %p162 = scmp.lt.s32.totalorder %s13, 3
      %p163 = pnand %p161, %p162
      %p164 = pneg %p163
      // Predicated region
      $region9: #{upsample_block2d.3} parent=5 // pred_check
        _
      $region10: #{upsample_block2d.3} parent=5 // pred_check_branch
        %166 = sbr.rel (%p163) target = $region12
      $region11: #{upsample_block2d.3} parent=5 // pred_region
        %s167 = ssub.s32 %s13, 1
        // Predicated region
        $region13: #{upsample_block2d.3} parent=11 // pred_check
          %p168 = pneg %p81
        $region14: #{upsample_block2d.3} parent=11 // pred_check_branch
          %170 = sbr.rel (%p168) target = $region16
        $region15: #{upsample_block2d.3} parent=11 // pred_region
          _
        $region16: #{upsample_block2d.3} parent=11 // pred_fallthru
          _
        // Predicated region
        $region17: #{upsample_block2d.3} parent=11 // pred_check
          %p171 = pneg %p102
        $region18: #{upsample_block2d.3} parent=11 // pred_check_branch
          %173 = sbr.rel (%p171) target = $region20
        $region19: #{upsample_block2d.3} parent=11 // pred_region
          _
        $region20: #{upsample_block2d.3} parent=11 // pred_fallthru
          _
        // Predicated region
        $region21: #{upsample_block2d.3} parent=11 // pred_check
          %p174 = pneg %p123
        $region22: #{upsample_block2d.3} parent=11 // pred_check_branch
          %176 = sbr.rel (%p174) target = $region24
        $region23: #{upsample_block2d.3} parent=11 // pred_region
          _
        $region24: #{upsample_block2d.3} parent=11 // pred_fallthru
          _
      $region12: #{upsample_block2d.3} parent=5 // pred_fallthru
        _
      %p177 = scmp.lt.s32.totalorder %s13, 2
      // Predicated region
      $region25: #{upsample_block2d.3} parent=5 // pred_check
        %p178 = pneg %p177
      $region26: #{upsample_block2d.3} parent=5 // pred_check_branch
        %180 = sbr.rel (%p178) target = $region28
      $region27: #{upsample_block2d.3} parent=5 // pred_region
        // Predicated region
        $region29: #{upsample_block2d.3} parent=27 // pred_check
          %p181 = pneg %p54
        $region30: #{upsample_block2d.3} parent=27 // pred_check_branch
          %183 = sbr.rel (%p181) target = $region32
        $region31: #{upsample_block2d.3} parent=27 // pred_region
          %p184 = scmp.lt.s32.totalorder %s20, 1
          %s185 = scalar_select %p184, %s20, 1
          %p186 = scmp.lt.s32.totalorder %s21, 0
          %s187 = scalar_select %p186, %s21, 0
          %s188 = smul.addr %s185, 4
          %s189 = sadd.s32 %s187, %s188
          %s190 = smul.addr %s189, 8
          %s191 = scalar_lea.vmem %s0, %s190
        $region32: #{upsample_block2d.3} parent=27 // pred_fallthru
          _
      $region28: #{upsample_block2d.3} parent=5 // pred_fallthru
        _
      %p192 = scmp.le.s32.totalorder 1, %s13
      %p193 = scmp.lt.s32.totalorder %s13, 3
      %p194 = pnand %p192, %p193
      %p195 = pneg %p194
      // Predicated region
      $region33: #{upsample_block2d.3} parent=5 // pred_check
        _
      $region34: #{upsample_block2d.3} parent=5 // pred_check_branch
        %197 = sbr.rel (%p194) target = $region36
      $region35: #{upsample_block2d.3} parent=5 // pred_region
        %s198 = ssub.s32 %s13, 1
        %p199 = scmp.lt.s32.totalorder %s23, 1
        %s200 = scalar_select %p199, %s23, 1
        %p201 = scmp.lt.s32.totalorder %s24, 0
        %s202 = scalar_select %p201, %s24, 0
        %s203 = smul.addr %s200, 4
        %s204 = sadd.s32 %s202, %s203
        %s205 = smul.addr %s204, 8
        %s206 = scalar_lea.vmem %s0, %s205
        %p207 = pneg %p60
        %p208 = pneg %p57
        %p209 = pneg %p81
        %p210 = pneg %p78
        %p211 = pneg %p102
        %p212 = pneg %p99
        %p213 = pneg %p123
        %p214 = pneg %p120
        %p215 = pneg %p153
        %p216 = pneg %p150
        %s217 = sand.u32 %s140, 1
        %s218 = scalar_lea.sflag [#allocation3], %s217
        %s219 = sand.u32 %s140, 1
        %s220 = smul.addr %s219, 64
        %s221 = scalar_lea.vmem [#allocation2], %s220
        %p222 = scmp.lt.s32.totalorder %s23, 1
        %s223 = scalar_select %p222, %s23, 1
        %p224 = scmp.lt.s32.totalorder %s24, 0
        %s225 = scalar_select %p224, %s24, 0
        %s226 = smul.addr %s223, 4
        %s227 = sadd.s32 %s225, %s226
        %s228 = smul.addr %s227, 8
        %s229 = scalar_lea.vmem %s0, %s228
        %s230 = sadd.s32 %s24, %s25
        %s231 = smul.u32 %s25, 8
        %s232 = scalar_lea.vmem %s229, %s231
        %v233 = vld [vmem:[%s232] sm:$0xff]
        %v234 = vld [vmem:[%s232 + $0x8] sm:$0xff]
        %v235 = vld [vmem:[%s232 + $0x10] sm:$0xff]
        %v236 = vld [vmem:[%s232 + $0x18] sm:$0xff]
        %v237 = vld [vmem:[%s2] sm:$0xff]
        %v238 = vld [vmem:[%s2 + $0x8] sm:$0xff]
        %v239 = vld [vmem:[%s2 + $0x10] sm:$0xff]
        %v240 = vld [vmem:[%s2 + $0x18] sm:$0xff]
        %vm241 = vcmask 261120
        %v243 = vsel %vm241, %v233, 0
        %v246 = vsel %vm241, %v234, 0
        %v249 = vsel %vm241, %v235, 0
        %v252 = vsel %vm241, %v236, 0
        %254 = vmatprep.subr.mxu0 0.0
        %255 = vmatpush1.msra.mxu0 0.0
        %256 = vmatprep.subr.mxu0 0.0
        %257 = vmatpush1.msra.mxu0 0.0
        %258 = vmatprep.subr.mxu0 0.0
        %259 = vmatpush1.msra.mxu0 0.0
        %260 = vmatprep.subr.mxu0 0.0
        %261 = vmatpush1.msra.mxu0 0.0
        %262 = vmatprep.subr.mxu0 0.0
        %263 = vmatpush1.msra.mxu0 0.0
        %264 = vmatprep.subr.mxu0 0.0
        %265 = vmatpush1.msra.mxu0 0.0
        %266 = vmatprep.subr.mxu0 0.0
        %267 = vmatpush1.msra.mxu0 0.0
        %268 = vmatprep.subr.mxu0 0.0
        %269 = vmatpush1.msra.mxu0 0.0
        %270 = vmatprep.subr.mxu0 0.0
        %271 = vmatpush1.msra.mxu0 0.0
        %272 = vmatprep.subr.mxu0 0.0
        %273 = vmatpush1.msra.mxu0 0.0
        %274 = vmatprep.subr.mxu0 0.0
        %275 = vmatpush1.msra.mxu0 0.0
        %276 = vmatprep.subr.mxu0 0.0
        %277 = vmatpush1.msra.mxu0 0.0
        %278 = vmatprep.subr.mxu0 0.0
        %279 = vmatpush1.msra.mxu0 %v240
        %280 = vmatprep.subr.mxu0 0.0
        %281 = vmatpush1.msra.mxu0 %v239
        %282 = vmatprep.subr.mxu0 0.0
        %283 = vmatpush1.msra.mxu0 %v238
        %284 = vmatprep.subr.mxu0 0.0
        %285 = vmatpush1.msra.mxu0 %v237
        %286 = vmatprep.subr.mxu0 0.0
        %287 = vmatpush2.msra.mxu0 0.0
        %288 = vmatprep.subr.mxu0 0.0
        %289 = vmatpush2.msra.mxu0 0.0
        %290 = vmatprep.subr.mxu0 0.0
        %291 = vmatpush2.msra.mxu0 0.0
        %292 = vmatprep.subr.mxu0 0.0
        %293 = vmatpush2.msra.mxu0 0.0
        %294 = vmatprep.subr.mxu0 0.0
        %295 = vmatpush2.msra.mxu0 0.0
        %296 = vmatprep.subr.mxu0 0.0
        %297 = vmatpush2.msra.mxu0 0.0
        %298 = vmatprep.subr.mxu0 0.0
        %299 = vmatpush2.msra.mxu0 0.0
        %300 = vmatprep.subr.mxu0 0.0
        %301 = vmatpush2.msra.mxu0 0.0
        %302 = vmatprep.subr.mxu0 0.0
        %303 = vmatpush2.msra.mxu0 0.0
        %304 = vmatprep.subr.mxu0 0.0
        %305 = vmatpush2.msra.mxu0 0.0
        %306 = vmatprep.subr.mxu0 0.0
        %307 = vmatpush2.msra.mxu0 0.0
        %308 = vmatprep.subr.mxu0 0.0
        %309 = vmatpush2.msra.mxu0 0.0
        %310 = vmatprep.subr.mxu0 0.0
        %311 = vmatpush2.msra.mxu0 0.0
        %312 = vmatprep.subr.mxu0 0.0
        %313 = vmatpush2.msra.mxu0 0.0
        %314 = vmatprep.subr.mxu0 0.0
        %315 = vmatpush2.msra.mxu0 0.0
        %316 = vmatprep.subr.mxu0 0.0
        %317 = vmatpush2.msra.mxu0 0.0
        %318 = vmatprep.mubr.f32.mxu0 0.0
        %319 = vmatmul.mubr.f32.gmra.mxu0 %v243
        %v320 = vpop.f32.mrf.mxu0
        %v321 = vadd.f32 0.0, %v320
        %v322 = vpop.f32.mrf.mxu0
        %323 = vmatprep.mubr.f32.mxu0 0.0
        %324 = vmatmul.mubr.f32.gmra.mxu0 %v246
        %v325 = vpop.f32.mrf.mxu0
        %v326 = vadd.f32 0.0, %v325
        %v327 = vpop.f32.mrf.mxu0
        %328 = vmatprep.mubr.f32.mxu0 0.0
        %329 = vmatmul.mubr.f32.gmra.mxu0 %v249
        %v330 = vpop.f32.mrf.mxu0
        %v331 = vadd.f32 0.0, %v330
        %v332 = vpop.f32.mrf.mxu0
        %333 = vmatprep.mubr.f32.mxu0 0.0
        %334 = vmatmul.mubr.f32.gmra.mxu0 %v252
        %v335 = vpop.f32.mrf.mxu0
        %v336 = vadd.f32 0.0, %v335
        %v337 = vpop.f32.mrf.mxu0
        %338 = vdwg.mxu0
        %v339 = vld [vmem:[%s1] sm:$0xff]
        %v340 = vld [vmem:[%s3] sm:$0xff]
        %342 = vset.pattern.permute.xlu0 0
        %343 = vperm.xlu0 %342, %v340
        %v344 = vpop.permute.xlu0 %343
        %v350 = vrot.slane %v326, 7
        %vm351 = vcmask 1041409
        %v352 = vsel %vm351, %v350, %v321
        %v353 = vrot.slane %v331, 6
        %vm354 = vcmask 1042434
        %v355 = vsel %vm354, %v353, %v352
        %v356 = vrot.slane %v336, 5
        %vm357 = vcmask 1043459
        %v358 = vsel %vm357, %v356, %v355
        %vm359 = vcmask 31744
        %v361 = vsel %vm359, %v339, 0
        %vm363 = vcmask 1043456
        %v364 = vsel %vm363, %v358, 0
        %366 = vmatprep.subr.mxu0 0.0
        %367 = vmatpush1.msra.mxu0 0.0
        %368 = vmatprep.subr.mxu0 0.0
        %369 = vmatpush1.msra.mxu0 0.0
        %370 = vmatprep.subr.mxu0 0.0
        %371 = vmatpush1.msra.mxu0 0.0
        %372 = vmatprep.subr.mxu0 0.0
        %373 = vmatpush1.msra.mxu0 0.0
        %374 = vmatprep.subr.mxu0 0.0
        %375 = vmatpush1.msra.mxu0 0.0
        %376 = vmatprep.subr.mxu0 0.0
        %377 = vmatpush1.msra.mxu0 0.0
        %378 = vmatprep.subr.mxu0 0.0
        %379 = vmatpush1.msra.mxu0 0.0
        %380 = vmatprep.subr.mxu0 0.0
        %381 = vmatpush1.msra.mxu0 0.0
        %382 = vmatprep.subr.mxu0 0.0
        %383 = vmatpush1.msra.mxu0 0.0
        %384 = vmatprep.subr.mxu0 0.0
        %385 = vmatpush1.msra.mxu0 0.0
        %386 = vmatprep.subr.mxu0 0.0
        %387 = vmatpush1.msra.mxu0 0.0
        %388 = vmatprep.subr.mxu0 0.0
        %389 = vmatpush1.msra.mxu0 0.0
        %390 = vmatprep.subr.mxu0 0.0
        %391 = vmatpush1.msra.mxu0 0.0
        %392 = vmatprep.subr.mxu0 0.0
        %393 = vmatpush1.msra.mxu0 0.0
        %394 = vmatprep.subr.mxu0 0.0
        %395 = vmatpush1.msra.mxu0 0.0
        %396 = vmatprep.subr.mxu0 0.0
        %397 = vmatpush1.msra.mxu0 %v364
        %398 = vmatprep.subr.mxu0 0.0
        %399 = vmatpush2.msra.mxu0 0.0
        %400 = vmatprep.subr.mxu0 0.0
        %401 = vmatpush2.msra.mxu0 0.0
        %402 = vmatprep.subr.mxu0 0.0
        %403 = vmatpush2.msra.mxu0 0.0
        %404 = vmatprep.subr.mxu0 0.0
        %405 = vmatpush2.msra.mxu0 0.0
        %406 = vmatprep.subr.mxu0 0.0
        %407 = vmatpush2.msra.mxu0 0.0
        %408 = vmatprep.subr.mxu0 0.0
        %409 = vmatpush2.msra.mxu0 0.0
        %410 = vmatprep.subr.mxu0 0.0
        %411 = vmatpush2.msra.mxu0 0.0
        %412 = vmatprep.subr.mxu0 0.0
        %413 = vmatpush2.msra.mxu0 0.0
        %414 = vmatprep.subr.mxu0 0.0
        %415 = vmatpush2.msra.mxu0 0.0
        %416 = vmatprep.subr.mxu0 0.0
        %417 = vmatpush2.msra.mxu0 0.0
        %418 = vmatprep.subr.mxu0 0.0
        %419 = vmatpush2.msra.mxu0 0.0
        %420 = vmatprep.subr.mxu0 0.0
        %421 = vmatpush2.msra.mxu0 0.0
        %422 = vmatprep.subr.mxu0 0.0
        %423 = vmatpush2.msra.mxu0 0.0
        %424 = vmatprep.subr.mxu0 0.0
        %425 = vmatpush2.msra.mxu0 0.0
        %426 = vmatprep.subr.mxu0 0.0
        %427 = vmatpush2.msra.mxu0 0.0
        %428 = vmatprep.subr.mxu0 0.0
        %429 = vmatpush2.msra.mxu0 0.0
        %430 = vmatprep.mubr.f32.mxu0 0.0
        %431 = vmatmul.mubr.f32.gmra.mxu0 %v361
        %v432 = vpop.f32.mrf.mxu0
        %v433 = vadd.f32 %v344, %v432
        %v434 = vpop.f32.mrf.mxu0
        %435 = vdwg.mxu0
        %v437 = vcombine.high %v433, %v433
        %v439 = vunpack.c.l.s4 1966171168
        %v440 = vunpack.c.0.s8 %v439
        %v441 = vlaneseq
        %v442 = vshrl.u32 %v441, 7
        %v443 = vsub.s32 %v440, %v442
        %v444 = vrot.slane %v433, %v443
        %v446 = vunpack.c.l.s4 1966171168
        %v447 = vunpack.c.0.s8 %v446
        %v448 = vlaneseq
        %v449 = vshrl.u32 %v448, 7
        %v450 = vsub.s32 %v447, %v449
        %v451 = vrot.slane %v437, %v450
        %v452 = vcombine.high %v444, %v444
        %v453 = vcombine.high %v451, %v451
        %v455 = vunpack.c.l.s4 1966171168
        %v456 = vunpack.c.0.s8 %v455
        %v457 = vlaneseq
        %v458 = vshrl.u32 %v457, 7
        %v459 = vsub.s32 %v456, %v458
        %v460 = vrot.slane %v444, %v459
        %v462 = vunpack.c.l.s4 1966171168
        %v463 = vunpack.c.0.s8 %v462
        %v464 = vlaneseq
        %v465 = vshrl.u32 %v464, 7
        %v466 = vsub.s32 %v463, %v465
        %v467 = vrot.slane %v451, %v466
        %v469 = vunpack.c.l.s4 1966171168
        %v470 = vunpack.c.0.s8 %v469
        %v471 = vlaneseq
        %v472 = vshrl.u32 %v471, 7
        %v473 = vsub.s32 %v470, %v472
        %v474 = vrot.slane %v452, %v473
        %v476 = vunpack.c.l.s4 1966171168
        %v477 = vunpack.c.0.s8 %v476
        %v478 = vlaneseq
        %v479 = vshrl.u32 %v478, 7
        %v480 = vsub.s32 %v477, %v479
        %v481 = vrot.slane %v453, %v480
        %v482 = vcombine.high %v460, %v460
        %v483 = vcombine.high %v467, %v467
        %v484 = vcombine.high %v474, %v474
        %v485 = vcombine.high %v481, %v481
        %vm494 = vcmask 57344
        %495 = vst.msk [vmem:[%s221] sm:$0x1] %vm494, %v460
        %496 = vst.msk [vmem:[%s221 + $0x8] sm:$0x1] %vm494, %v474
        %497 = vst.msk [vmem:[%s221 + $0x10] sm:$0x1] %vm494, %v482
        %498 = vst.msk [vmem:[%s221 + $0x18] sm:$0x1] %vm494, %v484
        %499 = vst.msk [vmem:[%s221 + $0x20] sm:$0x1] %vm494, %v467
        %500 = vst.msk [vmem:[%s221 + $0x28] sm:$0x1] %vm494, %v481
        %501 = vst.msk [vmem:[%s221 + $0x30] sm:$0x1] %vm494, %v483
        %502 = vst.msk [vmem:[%s221 + $0x38] sm:$0x1] %vm494, %v485
        %v503 = vrot.slane %v321, 1
        %v504 = vsel %vm351, %v326, %v503
        %v505 = vrot.slane %v331, 7
        %v506 = vsel %vm354, %v505, %v504
        %v507 = vrot.slane %v336, 6
        %v508 = vsel %vm357, %v507, %v506
        %v509 = vsel %vm363, %v508, 0
        %511 = vmatprep.subr.mxu0 0.0
        %512 = vmatpush1.msra.mxu0 0.0
        %513 = vmatprep.subr.mxu0 0.0
        %514 = vmatpush1.msra.mxu0 0.0
        %515 = vmatprep.subr.mxu0 0.0
        %516 = vmatpush1.msra.mxu0 0.0
        %517 = vmatprep.subr.mxu0 0.0
        %518 = vmatpush1.msra.mxu0 0.0
        %519 = vmatprep.subr.mxu0 0.0
        %520 = vmatpush1.msra.mxu0 0.0
        %521 = vmatprep.subr.mxu0 0.0
        %522 = vmatpush1.msra.mxu0 0.0
        %523 = vmatprep.subr.mxu0 0.0
        %524 = vmatpush1.msra.mxu0 0.0
        %525 = vmatprep.subr.mxu0 0.0
        %526 = vmatpush1.msra.mxu0 0.0
        %527 = vmatprep.subr.mxu0 0.0
        %528 = vmatpush1.msra.mxu0 0.0
        %529 = vmatprep.subr.mxu0 0.0
        %530 = vmatpush1.msra.mxu0 0.0
        %531 = vmatprep.subr.mxu0 0.0
        %532 = vmatpush1.msra.mxu0 0.0
        %533 = vmatprep.subr.mxu0 0.0
        %534 = vmatpush1.msra.mxu0 0.0
        %535 = vmatprep.subr.mxu0 0.0
        %536 = vmatpush1.msra.mxu0 0.0
        %537 = vmatprep.subr.mxu0 0.0
        %538 = vmatpush1.msra.mxu0 0.0
        %539 = vmatprep.subr.mxu0 0.0
        %540 = vmatpush1.msra.mxu0 0.0
        %541 = vmatprep.subr.mxu0 0.0
        %542 = vmatpush1.msra.mxu0 %v509
        %543 = vmatprep.subr.mxu0 0.0
        %544 = vmatpush2.msra.mxu0 0.0
        %545 = vmatprep.subr.mxu0 0.0
        %546 = vmatpush2.msra.mxu0 0.0
        %547 = vmatprep.subr.mxu0 0.0
        %548 = vmatpush2.msra.mxu0 0.0
        %549 = vmatprep.subr.mxu0 0.0
        %550 = vmatpush2.msra.mxu0 0.0
        %551 = vmatprep.subr.mxu0 0.0
        %552 = vmatpush2.msra.mxu0 0.0
        %553 = vmatprep.subr.mxu0 0.0
        %554 = vmatpush2.msra.mxu0 0.0
        %555 = vmatprep.subr.mxu0 0.0
        %556 = vmatpush2.msra.mxu0 0.0
        %557 = vmatprep.subr.mxu0 0.0
        %558 = vmatpush2.msra.mxu0 0.0
        %559 = vmatprep.subr.mxu0 0.0
        %560 = vmatpush2.msra.mxu0 0.0
        %561 = vmatprep.subr.mxu0 0.0
        %562 = vmatpush2.msra.mxu0 0.0
        %563 = vmatprep.subr.mxu0 0.0
        %564 = vmatpush2.msra.mxu0 0.0
        %565 = vmatprep.subr.mxu0 0.0
        %566 = vmatpush2.msra.mxu0 0.0
        %567 = vmatprep.subr.mxu0 0.0
        %568 = vmatpush2.msra.mxu0 0.0
        %569 = vmatprep.subr.mxu0 0.0
        %570 = vmatpush2.msra.mxu0 0.0
        %571 = vmatprep.subr.mxu0 0.0
        %572 = vmatpush2.msra.mxu0 0.0
        %573 = vmatprep.subr.mxu0 0.0
        %574 = vmatpush2.msra.mxu0 0.0
        %575 = vmatprep.mubr.f32.mxu0 0.0
        %576 = vmatmul.mubr.f32.gmra.mxu0 %v361
        %v577 = vpop.f32.mrf.mxu0
        %v578 = vadd.f32 %v344, %v577
        %v579 = vpop.f32.mrf.mxu0
        %580 = vdwg.mxu0
        %v582 = vcombine.high %v578, %v578
        %v584 = vunpack.c.l.s4 1966171168
        %v585 = vunpack.c.0.s8 %v584
        %v586 = vlaneseq
        %v587 = vshrl.u32 %v586, 7
        %v588 = vsub.s32 %v585, %v587
        %v589 = vrot.slane %v578, %v588
        %v591 = vunpack.c.l.s4 1966171168
        %v592 = vunpack.c.0.s8 %v591
        %v593 = vlaneseq
        %v594 = vshrl.u32 %v593, 7
        %v595 = vsub.s32 %v592, %v594
        %v596 = vrot.slane %v582, %v595
        %v597 = vcombine.high %v589, %v589
        %v598 = vcombine.high %v596, %v596
        %v600 = vunpack.c.l.s4 1966171168
        %v601 = vunpack.c.0.s8 %v600
        %v602 = vlaneseq
        %v603 = vshrl.u32 %v602, 7
        %v604 = vsub.s32 %v601, %v603
        %v605 = vrot.slane %v589, %v604
        %v607 = vunpack.c.l.s4 1966171168
        %v608 = vunpack.c.0.s8 %v607
        %v609 = vlaneseq
        %v610 = vshrl.u32 %v609, 7
        %v611 = vsub.s32 %v608, %v610
        %v612 = vrot.slane %v596, %v611
        %v614 = vunpack.c.l.s4 1966171168
        %v615 = vunpack.c.0.s8 %v614
        %v616 = vlaneseq
        %v617 = vshrl.u32 %v616, 7
        %v618 = vsub.s32 %v615, %v617
        %v619 = vrot.slane %v597, %v618
        %v621 = vunpack.c.l.s4 1966171168
        %v622 = vunpack.c.0.s8 %v621
        %v623 = vlaneseq
        %v624 = vshrl.u32 %v623, 7
        %v625 = vsub.s32 %v622, %v624
        %v626 = vrot.slane %v598, %v625
        %v627 = vcombine.high %v605, %v605
        %v628 = vcombine.high %v612, %v612
        %v629 = vcombine.high %v619, %v619
        %v630 = vcombine.high %v626, %v626
        %639 = vst.msk [vmem:[%s221 + $0x1] sm:$0x1] %vm494, %v605
        %640 = vst.msk [vmem:[%s221 + $0x9] sm:$0x1] %vm494, %v619
        %641 = vst.msk [vmem:[%s221 + $0x11] sm:$0x1] %vm494, %v627
        %642 = vst.msk [vmem:[%s221 + $0x19] sm:$0x1] %vm494, %v629
        %643 = vst.msk [vmem:[%s221 + $0x21] sm:$0x1] %vm494, %v612
        %644 = vst.msk [vmem:[%s221 + $0x29] sm:$0x1] %vm494, %v626
        %645 = vst.msk [vmem:[%s221 + $0x31] sm:$0x1] %vm494, %v628
        %646 = vst.msk [vmem:[%s221 + $0x39] sm:$0x1] %vm494, %v630
        %v647 = vrot.slane %v321, 2
        %v648 = vrot.slane %v326, 1
        %v649 = vsel %vm351, %v648, %v647
        %v650 = vsel %vm354, %v331, %v649
        %v651 = vrot.slane %v336, 7
        %v652 = vsel %vm357, %v651, %v650
        %v653 = vsel %vm363, %v652, 0
        %655 = vmatprep.subr.mxu0 0.0
        %656 = vmatpush1.msra.mxu0 0.0
        %657 = vmatprep.subr.mxu0 0.0
        %658 = vmatpush1.msra.mxu0 0.0
        %659 = vmatprep.subr.mxu0 0.0
        %660 = vmatpush1.msra.mxu0 0.0
        %661 = vmatprep.subr.mxu0 0.0
        %662 = vmatpush1.msra.mxu0 0.0
        %663 = vmatprep.subr.mxu0 0.0
        %664 = vmatpush1.msra.mxu0 0.0
        %665 = vmatprep.subr.mxu0 0.0
        %666 = vmatpush1.msra.mxu0 0.0
        %667 = vmatprep.subr.mxu0 0.0
        %668 = vmatpush1.msra.mxu0 0.0
        %669 = vmatprep.subr.mxu0 0.0
        %670 = vmatpush1.msra.mxu0 0.0
        %671 = vmatprep.subr.mxu0 0.0
        %672 = vmatpush1.msra.mxu0 0.0
        %673 = vmatprep.subr.mxu0 0.0
        %674 = vmatpush1.msra.mxu0 0.0
        %675 = vmatprep.subr.mxu0 0.0
        %676 = vmatpush1.msra.mxu0 0.0
        %677 = vmatprep.subr.mxu0 0.0
        %678 = vmatpush1.msra.mxu0 0.0
        %679 = vmatprep.subr.mxu0 0.0
        %680 = vmatpush1.msra.mxu0 0.0
        %681 = vmatprep.subr.mxu0 0.0
        %682 = vmatpush1.msra.mxu0 0.0
        %683 = vmatprep.subr.mxu0 0.0
        %684 = vmatpush1.msra.mxu0 0.0
        %685 = vmatprep.subr.mxu0 0.0
        %686 = vmatpush1.msra.mxu0 %v653
        %687 = vmatprep.subr.mxu0 0.0
        %688 = vmatpush2.msra.mxu0 0.0
        %689 = vmatprep.subr.mxu0 0.0
        %690 = vmatpush2.msra.mxu0 0.0
        %691 = vmatprep.subr.mxu0 0.0
        %692 = vmatpush2.msra.mxu0 0.0
        %693 = vmatprep.subr.mxu0 0.0
        %694 = vmatpush2.msra.mxu0 0.0
        %695 = vmatprep.subr.mxu0 0.0
        %696 = vmatpush2.msra.mxu0 0.0
        %697 = vmatprep.subr.mxu0 0.0
        %698 = vmatpush2.msra.mxu0 0.0
        %699 = vmatprep.subr.mxu0 0.0
        %700 = vmatpush2.msra.mxu0 0.0
        %701 = vmatprep.subr.mxu0 0.0
        %702 = vmatpush2.msra.mxu0 0.0
        %703 = vmatprep.subr.mxu0 0.0
        %704 = vmatpush2.msra.mxu0 0.0
        %705 = vmatprep.subr.mxu0 0.0
        %706 = vmatpush2.msra.mxu0 0.0
        %707 = vmatprep.subr.mxu0 0.0
        %708 = vmatpush2.msra.mxu0 0.0
        %709 = vmatprep.subr.mxu0 0.0
        %710 = vmatpush2.msra.mxu0 0.0
        %711 = vmatprep.subr.mxu0 0.0
        %712 = vmatpush2.msra.mxu0 0.0
        %713 = vmatprep.subr.mxu0 0.0
        %714 = vmatpush2.msra.mxu0 0.0
        %715 = vmatprep.subr.mxu0 0.0
        %716 = vmatpush2.msra.mxu0 0.0
        %717 = vmatprep.subr.mxu0 0.0
        %718 = vmatpush2.msra.mxu0 0.0
        %719 = vmatprep.mubr.f32.mxu0 0.0
        %720 = vmatmul.mubr.f32.gmra.mxu0 %v361
        %v721 = vpop.f32.mrf.mxu0
        %v722 = vadd.f32 %v344, %v721
        %v723 = vpop.f32.mrf.mxu0
        %724 = vdwg.mxu0
        %v726 = vcombine.high %v722, %v722
        %v728 = vunpack.c.l.s4 1966171168
        %v729 = vunpack.c.0.s8 %v728
        %v730 = vlaneseq
        %v731 = vshrl.u32 %v730, 7
        %v732 = vsub.s32 %v729, %v731
        %v733 = vrot.slane %v722, %v732
        %v735 = vunpack.c.l.s4 1966171168
        %v736 = vunpack.c.0.s8 %v735
        %v737 = vlaneseq
        %v738 = vshrl.u32 %v737, 7
        %v739 = vsub.s32 %v736, %v738
        %v740 = vrot.slane %v726, %v739
        %v741 = vcombine.high %v733, %v733
        %v742 = vcombine.high %v740, %v740
        %v744 = vunpack.c.l.s4 1966171168
        %v745 = vunpack.c.0.s8 %v744
        %v746 = vlaneseq
        %v747 = vshrl.u32 %v746, 7
        %v748 = vsub.s32 %v745, %v747
        %v749 = vrot.slane %v733, %v748
        %v751 = vunpack.c.l.s4 1966171168
        %v752 = vunpack.c.0.s8 %v751
        %v753 = vlaneseq
        %v754 = vshrl.u32 %v753, 7
        %v755 = vsub.s32 %v752, %v754
        %v756 = vrot.slane %v740, %v755
        %v758 = vunpack.c.l.s4 1966171168
        %v759 = vunpack.c.0.s8 %v758
        %v760 = vlaneseq
        %v761 = vshrl.u32 %v760, 7
        %v762 = vsub.s32 %v759, %v761
        %v763 = vrot.slane %v741, %v762
        %v765 = vunpack.c.l.s4 1966171168
        %v766 = vunpack.c.0.s8 %v765
        %v767 = vlaneseq
        %v768 = vshrl.u32 %v767, 7
        %v769 = vsub.s32 %v766, %v768
        %v770 = vrot.slane %v742, %v769
        %v771 = vcombine.high %v749, %v749
        %v772 = vcombine.high %v756, %v756
        %v773 = vcombine.high %v763, %v763
        %v774 = vcombine.high %v770, %v770
        %783 = vst.msk [vmem:[%s221 + $0x2] sm:$0x1] %vm494, %v749
        %784 = vst.msk [vmem:[%s221 + $0xa] sm:$0x1] %vm494, %v763
        %785 = vst.msk [vmem:[%s221 + $0x12] sm:$0x1] %vm494, %v771
        %786 = vst.msk [vmem:[%s221 + $0x1a] sm:$0x1] %vm494, %v773
        %787 = vst.msk [vmem:[%s221 + $0x22] sm:$0x1] %vm494, %v756
        %788 = vst.msk [vmem:[%s221 + $0x2a] sm:$0x1] %vm494, %v770
        %789 = vst.msk [vmem:[%s221 + $0x32] sm:$0x1] %vm494, %v772
        %790 = vst.msk [vmem:[%s221 + $0x3a] sm:$0x1] %vm494, %v774
        %v791 = vrot.slane %v321, 3
        %v792 = vrot.slane %v326, 2
        %v793 = vsel %vm351, %v792, %v791
        %v794 = vrot.slane %v331, 1
        %v795 = vsel %vm354, %v794, %v793
        %v796 = vsel %vm357, %v336, %v795
        %v797 = vsel %vm363, %v796, 0
        %799 = vmatprep.subr.mxu0 0.0
        %800 = vmatpush1.msra.mxu0 0.0
        %801 = vmatprep.subr.mxu0 0.0
        %802 = vmatpush1.msra.mxu0 0.0
        %803 = vmatprep.subr.mxu0 0.0
        %804 = vmatpush1.msra.mxu0 0.0
        %805 = vmatprep.subr.mxu0 0.0
        %806 = vmatpush1.msra.mxu0 0.0
        %807 = vmatprep.subr.mxu0 0.0
        %808 = vmatpush1.msra.mxu0 0.0
        %809 = vmatprep.subr.mxu0 0.0
        %810 = vmatpush1.msra.mxu0 0.0
        %811 = vmatprep.subr.mxu0 0.0
        %812 = vmatpush1.msra.mxu0 0.0
        %813 = vmatprep.subr.mxu0 0.0
        %814 = vmatpush1.msra.mxu0 0.0
        %815 = vmatprep.subr.mxu0 0.0
        %816 = vmatpush1.msra.mxu0 0.0
        %817 = vmatprep.subr.mxu0 0.0
        %818 = vmatpush1.msra.mxu0 0.0
        %819 = vmatprep.subr.mxu0 0.0
        %820 = vmatpush1.msra.mxu0 0.0
        %821 = vmatprep.subr.mxu0 0.0
        %822 = vmatpush1.msra.mxu0 0.0
        %823 = vmatprep.subr.mxu0 0.0
        %824 = vmatpush1.msra.mxu0 0.0
        %825 = vmatprep.subr.mxu0 0.0
        %826 = vmatpush1.msra.mxu0 0.0
        %827 = vmatprep.subr.mxu0 0.0
        %828 = vmatpush1.msra.mxu0 0.0
        %829 = vmatprep.subr.mxu0 0.0
        %830 = vmatpush1.msra.mxu0 %v797
        %831 = vmatprep.subr.mxu0 0.0
        %832 = vmatpush2.msra.mxu0 0.0
        %833 = vmatprep.subr.mxu0 0.0
        %834 = vmatpush2.msra.mxu0 0.0
        %835 = vmatprep.subr.mxu0 0.0
        %836 = vmatpush2.msra.mxu0 0.0
        %837 = vmatprep.subr.mxu0 0.0
        %838 = vmatpush2.msra.mxu0 0.0
        %839 = vmatprep.subr.mxu0 0.0
        %840 = vmatpush2.msra.mxu0 0.0
        %841 = vmatprep.subr.mxu0 0.0
        %842 = vmatpush2.msra.mxu0 0.0
        %843 = vmatprep.subr.mxu0 0.0
        %844 = vmatpush2.msra.mxu0 0.0
        %845 = vmatprep.subr.mxu0 0.0
        %846 = vmatpush2.msra.mxu0 0.0
        %847 = vmatprep.subr.mxu0 0.0
        %848 = vmatpush2.msra.mxu0 0.0
        %849 = vmatprep.subr.mxu0 0.0
        %850 = vmatpush2.msra.mxu0 0.0
        %851 = vmatprep.subr.mxu0 0.0
        %852 = vmatpush2.msra.mxu0 0.0
        %853 = vmatprep.subr.mxu0 0.0
        %854 = vmatpush2.msra.mxu0 0.0
        %855 = vmatprep.subr.mxu0 0.0
        %856 = vmatpush2.msra.mxu0 0.0
        %857 = vmatprep.subr.mxu0 0.0
        %858 = vmatpush2.msra.mxu0 0.0
        %859 = vmatprep.subr.mxu0 0.0
        %860 = vmatpush2.msra.mxu0 0.0
        %861 = vmatprep.subr.mxu0 0.0
        %862 = vmatpush2.msra.mxu0 0.0
        %863 = vmatprep.mubr.f32.mxu0 0.0
        %864 = vmatmul.mubr.f32.gmra.mxu0 %v361
        %v865 = vpop.f32.mrf.mxu0
        %v866 = vadd.f32 %v344, %v865
        %v867 = vpop.f32.mrf.mxu0
        %868 = vdwg.mxu0
        %v870 = vcombine.high %v866, %v866
        %v872 = vunpack.c.l.s4 1966171168
        %v873 = vunpack.c.0.s8 %v872
        %v874 = vlaneseq
        %v875 = vshrl.u32 %v874, 7
        %v876 = vsub.s32 %v873, %v875
        %v877 = vrot.slane %v866, %v876
        %v879 = vunpack.c.l.s4 1966171168
        %v880 = vunpack.c.0.s8 %v879
        %v881 = vlaneseq
        %v882 = vshrl.u32 %v881, 7
        %v883 = vsub.s32 %v880, %v882
        %v884 = vrot.slane %v870, %v883
        %v885 = vcombine.high %v877, %v877
        %v886 = vcombine.high %v884, %v884
        %v888 = vunpack.c.l.s4 1966171168
        %v889 = vunpack.c.0.s8 %v888
        %v890 = vlaneseq
        %v891 = vshrl.u32 %v890, 7
        %v892 = vsub.s32 %v889, %v891
        %v893 = vrot.slane %v877, %v892
        %v895 = vunpack.c.l.s4 1966171168
        %v896 = vunpack.c.0.s8 %v895
        %v897 = vlaneseq
        %v898 = vshrl.u32 %v897, 7
        %v899 = vsub.s32 %v896, %v898
        %v900 = vrot.slane %v884, %v899
        %v902 = vunpack.c.l.s4 1966171168
        %v903 = vunpack.c.0.s8 %v902
        %v904 = vlaneseq
        %v905 = vshrl.u32 %v904, 7
        %v906 = vsub.s32 %v903, %v905
        %v907 = vrot.slane %v885, %v906
        %v909 = vunpack.c.l.s4 1966171168
        %v910 = vunpack.c.0.s8 %v909
        %v911 = vlaneseq
        %v912 = vshrl.u32 %v911, 7
        %v913 = vsub.s32 %v910, %v912
        %v914 = vrot.slane %v886, %v913
        %v915 = vcombine.high %v893, %v893
        %v916 = vcombine.high %v900, %v900
        %v917 = vcombine.high %v907, %v907
        %v918 = vcombine.high %v914, %v914
        %927 = vst.msk [vmem:[%s221 + $0x3] sm:$0x1] %vm494, %v893
        %928 = vst.msk [vmem:[%s221 + $0xb] sm:$0x1] %vm494, %v907
        %929 = vst.msk [vmem:[%s221 + $0x13] sm:$0x1] %vm494, %v915
        %930 = vst.msk [vmem:[%s221 + $0x1b] sm:$0x1] %vm494, %v917
        %931 = vst.msk [vmem:[%s221 + $0x23] sm:$0x1] %vm494, %v900
        %932 = vst.msk [vmem:[%s221 + $0x2b] sm:$0x1] %vm494, %v914
        %933 = vst.msk [vmem:[%s221 + $0x33] sm:$0x1] %vm494, %v916
        %934 = vst.msk [vmem:[%s221 + $0x3b] sm:$0x1] %vm494, %v918
        %v935 = vrot.slane %v321, 4
        %v936 = vrot.slane %v326, 3
        %v937 = vsel %vm351, %v936, %v935
        %v938 = vrot.slane %v331, 2
        %v939 = vsel %vm354, %v938, %v937
        %v940 = vrot.slane %v336, 1
        %v941 = vsel %vm357, %v940, %v939
        %v942 = vsel %vm363, %v941, 0
        %944 = vmatprep.subr.mxu0 0.0
        %945 = vmatpush1.msra.mxu0 0.0
        %946 = vmatprep.subr.mxu0 0.0
        %947 = vmatpush1.msra.mxu0 0.0
        %948 = vmatprep.subr.mxu0 0.0
        %949 = vmatpush1.msra.mxu0 0.0
        %950 = vmatprep.subr.mxu0 0.0
        %951 = vmatpush1.msra.mxu0 0.0
        %952 = vmatprep.subr.mxu0 0.0
        %953 = vmatpush1.msra.mxu0 0.0
        %954 = vmatprep.subr.mxu0 0.0
        %955 = vmatpush1.msra.mxu0 0.0
        %956 = vmatprep.subr.mxu0 0.0
        %957 = vmatpush1.msra.mxu0 0.0
        %958 = vmatprep.subr.mxu0 0.0
        %959 = vmatpush1.msra.mxu0 0.0
        %960 = vmatprep.subr.mxu0 0.0
        %961 = vmatpush1.msra.mxu0 0.0
        %962 = vmatprep.subr.mxu0 0.0
        %963 = vmatpush1.msra.mxu0 0.0
        %964 = vmatprep.subr.mxu0 0.0
        %965 = vmatpush1.msra.mxu0 0.0
        %966 = vmatprep.subr.mxu0 0.0
        %967 = vmatpush1.msra.mxu0 0.0
        %968 = vmatprep.subr.mxu0 0.0
        %969 = vmatpush1.msra.mxu0 0.0
        %970 = vmatprep.subr.mxu0 0.0
        %971 = vmatpush1.msra.mxu0 0.0
        %972 = vmatprep.subr.mxu0 0.0
        %973 = vmatpush1.msra.mxu0 0.0
        %974 = vmatprep.subr.mxu0 0.0
        %975 = vmatpush1.msra.mxu0 %v942
        %976 = vmatprep.subr.mxu0 0.0
        %977 = vmatpush2.msra.mxu0 0.0
        %978 = vmatprep.subr.mxu0 0.0
        %979 = vmatpush2.msra.mxu0 0.0
        %980 = vmatprep.subr.mxu0 0.0
        %981 = vmatpush2.msra.mxu0 0.0
        %982 = vmatprep.subr.mxu0 0.0
        %983 = vmatpush2.msra.mxu0 0.0
        %984 = vmatprep.subr.mxu0 0.0
        %985 = vmatpush2.msra.mxu0 0.0
        %986 = vmatprep.subr.mxu0 0.0
        %987 = vmatpush2.msra.mxu0 0.0
        %988 = vmatprep.subr.mxu0 0.0
        %989 = vmatpush2.msra.mxu0 0.0
        %990 = vmatprep.subr.mxu0 0.0
        %991 = vmatpush2.msra.mxu0 0.0
        %992 = vmatprep.subr.mxu0 0.0
        %993 = vmatpush2.msra.mxu0 0.0
        %994 = vmatprep.subr.mxu0 0.0
        %995 = vmatpush2.msra.mxu0 0.0
        %996 = vmatprep.subr.mxu0 0.0
        %997 = vmatpush2.msra.mxu0 0.0
        %998 = vmatprep.subr.mxu0 0.0
        %999 = vmatpush2.msra.mxu0 0.0
        %1000 = vmatprep.subr.mxu0 0.0
        %1001 = vmatpush2.msra.mxu0 0.0
        %1002 = vmatprep.subr.mxu0 0.0
        %1003 = vmatpush2.msra.mxu0 0.0
        %1004 = vmatprep.subr.mxu0 0.0
        %1005 = vmatpush2.msra.mxu0 0.0
        %1006 = vmatprep.subr.mxu0 0.0
        %1007 = vmatpush2.msra.mxu0 0.0
        %1008 = vmatprep.mubr.f32.mxu0 0.0
        %1009 = vmatmul.mubr.f32.gmra.mxu0 %v361
        %v1010 = vpop.f32.mrf.mxu0
        %v1011 = vadd.f32 %v344, %v1010
        %v1012 = vpop.f32.mrf.mxu0
        %1013 = vdwg.mxu0
        %v1015 = vcombine.high %v1011, %v1011
        %v1017 = vunpack.c.l.s4 1966171168
        %v1018 = vunpack.c.0.s8 %v1017
        %v1019 = vlaneseq
        %v1020 = vshrl.u32 %v1019, 7
        %v1021 = vsub.s32 %v1018, %v1020
        %v1022 = vrot.slane %v1011, %v1021
        %v1024 = vunpack.c.l.s4 1966171168
        %v1025 = vunpack.c.0.s8 %v1024
        %v1026 = vlaneseq
        %v1027 = vshrl.u32 %v1026, 7
        %v1028 = vsub.s32 %v1025, %v1027
        %v1029 = vrot.slane %v1015, %v1028
        %v1030 = vcombine.high %v1022, %v1022
        %v1031 = vcombine.high %v1029, %v1029
        %v1033 = vunpack.c.l.s4 1966171168
        %v1034 = vunpack.c.0.s8 %v1033
        %v1035 = vlaneseq
        %v1036 = vshrl.u32 %v1035, 7
        %v1037 = vsub.s32 %v1034, %v1036
        %v1038 = vrot.slane %v1022, %v1037
        %v1040 = vunpack.c.l.s4 1966171168
        %v1041 = vunpack.c.0.s8 %v1040
        %v1042 = vlaneseq
        %v1043 = vshrl.u32 %v1042, 7
        %v1044 = vsub.s32 %v1041, %v1043
        %v1045 = vrot.slane %v1029, %v1044
        %v1047 = vunpack.c.l.s4 1966171168
        %v1048 = vunpack.c.0.s8 %v1047
        %v1049 = vlaneseq
        %v1050 = vshrl.u32 %v1049, 7
        %v1051 = vsub.s32 %v1048, %v1050
        %v1052 = vrot.slane %v1030, %v1051
        %v1054 = vunpack.c.l.s4 1966171168
        %v1055 = vunpack.c.0.s8 %v1054
        %v1056 = vlaneseq
        %v1057 = vshrl.u32 %v1056, 7
        %v1058 = vsub.s32 %v1055, %v1057
        %v1059 = vrot.slane %v1031, %v1058
        %v1060 = vcombine.high %v1038, %v1038
        %v1061 = vcombine.high %v1045, %v1045
        %v1062 = vcombine.high %v1052, %v1052
        %v1063 = vcombine.high %v1059, %v1059
        %1072 = vst.msk [vmem:[%s221 + $0x4] sm:$0x1] %vm494, %v1038
        %1073 = vst.msk [vmem:[%s221 + $0xc] sm:$0x1] %vm494, %v1052
        %1074 = vst.msk [vmem:[%s221 + $0x14] sm:$0x1] %vm494, %v1060
        %1075 = vst.msk [vmem:[%s221 + $0x1c] sm:$0x1] %vm494, %v1062
        %1076 = vst.msk [vmem:[%s221 + $0x24] sm:$0x1] %vm494, %v1045
        %1077 = vst.msk [vmem:[%s221 + $0x2c] sm:$0x1] %vm494, %v1059
        %1078 = vst.msk [vmem:[%s221 + $0x34] sm:$0x1] %vm494, %v1061
        %1079 = vst.msk [vmem:[%s221 + $0x3c] sm:$0x1] %vm494, %v1063
        %v1080 = vrot.slane %v321, 5
        %v1081 = vrot.slane %v326, 4
        %v1082 = vsel %vm351, %v1081, %v1080
        %v1083 = vrot.slane %v331, 3
        %v1084 = vsel %vm354, %v1083, %v1082
        %v1085 = vrot.slane %v336, 2
        %v1086 = vsel %vm357, %v1085, %v1084
        %v1087 = vsel %vm363, %v1086, 0
        %1089 = vmatprep.subr.mxu0 0.0
        %1090 = vmatpush1.msra.mxu0 0.0
        %1091 = vmatprep.subr.mxu0 0.0
        %1092 = vmatpush1.msra.mxu0 0.0
        %1093 = vmatprep.subr.mxu0 0.0
        %1094 = vmatpush1.msra.mxu0 0.0
        %1095 = vmatprep.subr.mxu0 0.0
        %1096 = vmatpush1.msra.mxu0 0.0
        %1097 = vmatprep.subr.mxu0 0.0
        %1098 = vmatpush1.msra.mxu0 0.0
        %1099 = vmatprep.subr.mxu0 0.0
        %1100 = vmatpush1.msra.mxu0 0.0
        %1101 = vmatprep.subr.mxu0 0.0
        %1102 = vmatpush1.msra.mxu0 0.0
        %1103 = vmatprep.subr.mxu0 0.0
        %1104 = vmatpush1.msra.mxu0 0.0
        %1105 = vmatprep.subr.mxu0 0.0
        %1106 = vmatpush1.msra.mxu0 0.0
        %1107 = vmatprep.subr.mxu0 0.0
        %1108 = vmatpush1.msra.mxu0 0.0
        %1109 = vmatprep.subr.mxu0 0.0
        %1110 = vmatpush1.msra.mxu0 0.0
        %1111 = vmatprep.subr.mxu0 0.0
        %1112 = vmatpush1.msra.mxu0 0.0
        %1113 = vmatprep.subr.mxu0 0.0
        %1114 = vmatpush1.msra.mxu0 0.0
        %1115 = vmatprep.subr.mxu0 0.0
        %1116 = vmatpush1.msra.mxu0 0.0
        %1117 = vmatprep.subr.mxu0 0.0
        %1118 = vmatpush1.msra.mxu0 0.0
        %1119 = vmatprep.subr.mxu0 0.0
        %1120 = vmatpush1.msra.mxu0 %v1087
        %1121 = vmatprep.subr.mxu0 0.0
        %1122 = vmatpush2.msra.mxu0 0.0
        %1123 = vmatprep.subr.mxu0 0.0
        %1124 = vmatpush2.msra.mxu0 0.0
        %1125 = vmatprep.subr.mxu0 0.0
        %1126 = vmatpush2.msra.mxu0 0.0
        %1127 = vmatprep.subr.mxu0 0.0
        %1128 = vmatpush2.msra.mxu0 0.0
        %1129 = vmatprep.subr.mxu0 0.0
        %1130 = vmatpush2.msra.mxu0 0.0
        %1131 = vmatprep.subr.mxu0 0.0
        %1132 = vmatpush2.msra.mxu0 0.0
        %1133 = vmatprep.subr.mxu0 0.0
        %1134 = vmatpush2.msra.mxu0 0.0
        %1135 = vmatprep.subr.mxu0 0.0
        %1136 = vmatpush2.msra.mxu0 0.0
        %1137 = vmatprep.subr.mxu0 0.0
        %1138 = vmatpush2.msra.mxu0 0.0
        %1139 = vmatprep.subr.mxu0 0.0
        %1140 = vmatpush2.msra.mxu0 0.0
        %1141 = vmatprep.subr.mxu0 0.0
        %1142 = vmatpush2.msra.mxu0 0.0
        %1143 = vmatprep.subr.mxu0 0.0
        %1144 = vmatpush2.msra.mxu0 0.0
        %1145 = vmatprep.subr.mxu0 0.0
        %1146 = vmatpush2.msra.mxu0 0.0
        %1147 = vmatprep.subr.mxu0 0.0
        %1148 = vmatpush2.msra.mxu0 0.0
        %1149 = vmatprep.subr.mxu0 0.0
        %1150 = vmatpush2.msra.mxu0 0.0
        %1151 = vmatprep.subr.mxu0 0.0
        %1152 = vmatpush2.msra.mxu0 0.0
        %1153 = vmatprep.mubr.f32.mxu0 0.0
        %1154 = vmatmul.mubr.f32.gmra.mxu0 %v361
        %v1155 = vpop.f32.mrf.mxu0
        %v1156 = vadd.f32 %v344, %v1155
        %v1157 = vpop.f32.mrf.mxu0
        %1158 = vdwg.mxu0
        %v1160 = vcombine.high %v1156, %v1156
        %v1162 = vunpack.c.l.s4 1966171168
        %v1163 = vunpack.c.0.s8 %v1162
        %v1164 = vlaneseq
        %v1165 = vshrl.u32 %v1164, 7
        %v1166 = vsub.s32 %v1163, %v1165
        %v1167 = vrot.slane %v1156, %v1166
        %v1169 = vunpack.c.l.s4 1966171168
        %v1170 = vunpack.c.0.s8 %v1169
        %v1171 = vlaneseq
        %v1172 = vshrl.u32 %v1171, 7
        %v1173 = vsub.s32 %v1170, %v1172
        %v1174 = vrot.slane %v1160, %v1173
        %v1175 = vcombine.high %v1167, %v1167
        %v1176 = vcombine.high %v1174, %v1174
        %v1178 = vunpack.c.l.s4 1966171168
        %v1179 = vunpack.c.0.s8 %v1178
        %v1180 = vlaneseq
        %v1181 = vshrl.u32 %v1180, 7
        %v1182 = vsub.s32 %v1179, %v1181
        %v1183 = vrot.slane %v1167, %v1182
        %v1185 = vunpack.c.l.s4 1966171168
        %v1186 = vunpack.c.0.s8 %v1185
        %v1187 = vlaneseq
        %v1188 = vshrl.u32 %v1187, 7
        %v1189 = vsub.s32 %v1186, %v1188
        %v1190 = vrot.slane %v1174, %v1189
        %v1192 = vunpack.c.l.s4 1966171168
        %v1193 = vunpack.c.0.s8 %v1192
        %v1194 = vlaneseq
        %v1195 = vshrl.u32 %v1194, 7
        %v1196 = vsub.s32 %v1193, %v1195
        %v1197 = vrot.slane %v1175, %v1196
        %v1199 = vunpack.c.l.s4 1966171168
        %v1200 = vunpack.c.0.s8 %v1199
        %v1201 = vlaneseq
        %v1202 = vshrl.u32 %v1201, 7
        %v1203 = vsub.s32 %v1200, %v1202
        %v1204 = vrot.slane %v1176, %v1203
        %v1205 = vcombine.high %v1183, %v1183
        %v1206 = vcombine.high %v1190, %v1190
        %v1207 = vcombine.high %v1197, %v1197
        %v1208 = vcombine.high %v1204, %v1204
        %1217 = vst.msk [vmem:[%s221 + $0x5] sm:$0x1] %vm494, %v1183
        %1218 = vst.msk [vmem:[%s221 + $0xd] sm:$0x1] %vm494, %v1197
        %1219 = vst.msk [vmem:[%s221 + $0x15] sm:$0x1] %vm494, %v1205
        %1220 = vst.msk [vmem:[%s221 + $0x1d] sm:$0x1] %vm494, %v1207
        %1221 = vst.msk [vmem:[%s221 + $0x25] sm:$0x1] %vm494, %v1190
        %1222 = vst.msk [vmem:[%s221 + $0x2d] sm:$0x1] %vm494, %v1204
        %1223 = vst.msk [vmem:[%s221 + $0x35] sm:$0x1] %vm494, %v1206
        %1224 = vst.msk [vmem:[%s221 + $0x3d] sm:$0x1] %vm494, %v1208
        %v1225 = vrot.slane %v321, 6
        %v1226 = vrot.slane %v326, 5
        %v1227 = vsel %vm351, %v1226, %v1225
        %v1228 = vrot.slane %v331, 4
        %v1229 = vsel %vm354, %v1228, %v1227
        %v1230 = vrot.slane %v336, 3
        %v1231 = vsel %vm357, %v1230, %v1229
        %v1232 = vsel %vm363, %v1231, 0
        %1234 = vmatprep.subr.mxu0 0.0
        %1235 = vmatpush1.msra.mxu0 0.0
        %1236 = vmatprep.subr.mxu0 0.0
        %1237 = vmatpush1.msra.mxu0 0.0
        %1238 = vmatprep.subr.mxu0 0.0
        %1239 = vmatpush1.msra.mxu0 0.0
        %1240 = vmatprep.subr.mxu0 0.0
        %1241 = vmatpush1.msra.mxu0 0.0
        %1242 = vmatprep.subr.mxu0 0.0
        %1243 = vmatpush1.msra.mxu0 0.0
        %1244 = vmatprep.subr.mxu0 0.0
        %1245 = vmatpush1.msra.mxu0 0.0
        %1246 = vmatprep.subr.mxu0 0.0
        %1247 = vmatpush1.msra.mxu0 0.0
        %1248 = vmatprep.subr.mxu0 0.0
        %1249 = vmatpush1.msra.mxu0 0.0
        %1250 = vmatprep.subr.mxu0 0.0
        %1251 = vmatpush1.msra.mxu0 0.0
        %1252 = vmatprep.subr.mxu0 0.0
        %1253 = vmatpush1.msra.mxu0 0.0
        %1254 = vmatprep.subr.mxu0 0.0
        %1255 = vmatpush1.msra.mxu0 0.0
        %1256 = vmatprep.subr.mxu0 0.0
        %1257 = vmatpush1.msra.mxu0 0.0
        %1258 = vmatprep.subr.mxu0 0.0
        %1259 = vmatpush1.msra.mxu0 0.0
        %1260 = vmatprep.subr.mxu0 0.0
        %1261 = vmatpush1.msra.mxu0 0.0
        %1262 = vmatprep.subr.mxu0 0.0
        %1263 = vmatpush1.msra.mxu0 0.0
        %1264 = vmatprep.subr.mxu0 0.0
        %1265 = vmatpush1.msra.mxu0 %v1232
        %1266 = vmatprep.subr.mxu0 0.0
        %1267 = vmatpush2.msra.mxu0 0.0
        %1268 = vmatprep.subr.mxu0 0.0
        %1269 = vmatpush2.msra.mxu0 0.0
        %1270 = vmatprep.subr.mxu0 0.0
        %1271 = vmatpush2.msra.mxu0 0.0
        %1272 = vmatprep.subr.mxu0 0.0
        %1273 = vmatpush2.msra.mxu0 0.0
        %1274 = vmatprep.subr.mxu0 0.0
        %1275 = vmatpush2.msra.mxu0 0.0
        %1276 = vmatprep.subr.mxu0 0.0
        %1277 = vmatpush2.msra.mxu0 0.0
        %1278 = vmatprep.subr.mxu0 0.0
        %1279 = vmatpush2.msra.mxu0 0.0
        %1280 = vmatprep.subr.mxu0 0.0
        %1281 = vmatpush2.msra.mxu0 0.0
        %1282 = vmatprep.subr.mxu0 0.0
        %1283 = vmatpush2.msra.mxu0 0.0
        %1284 = vmatprep.subr.mxu0 0.0
        %1285 = vmatpush2.msra.mxu0 0.0
        %1286 = vmatprep.subr.mxu0 0.0
        %1287 = vmatpush2.msra.mxu0 0.0
        %1288 = vmatprep.subr.mxu0 0.0
        %1289 = vmatpush2.msra.mxu0 0.0
        %1290 = vmatprep.subr.mxu0 0.0
        %1291 = vmatpush2.msra.mxu0 0.0
        %1292 = vmatprep.subr.mxu0 0.0
        %1293 = vmatpush2.msra.mxu0 0.0
        %1294 = vmatprep.subr.mxu0 0.0
        %1295 = vmatpush2.msra.mxu0 0.0
        %1296 = vmatprep.subr.mxu0 0.0
        %1297 = vmatpush2.msra.mxu0 0.0
        %1298 = vmatprep.mubr.f32.mxu0 0.0
        %1299 = vmatmul.mubr.f32.gmra.mxu0 %v361
        %v1300 = vpop.f32.mrf.mxu0
        %v1301 = vadd.f32 %v344, %v1300
        %v1302 = vpop.f32.mrf.mxu0
        %1303 = vdwg.mxu0
        %v1305 = vcombine.high %v1301, %v1301
        %v1307 = vunpack.c.l.s4 1966171168
        %v1308 = vunpack.c.0.s8 %v1307
        %v1309 = vlaneseq
        %v1310 = vshrl.u32 %v1309, 7
        %v1311 = vsub.s32 %v1308, %v1310
        %v1312 = vrot.slane %v1301, %v1311
        %v1314 = vunpack.c.l.s4 1966171168
        %v1315 = vunpack.c.0.s8 %v1314
        %v1316 = vlaneseq
        %v1317 = vshrl.u32 %v1316, 7
        %v1318 = vsub.s32 %v1315, %v1317
        %v1319 = vrot.slane %v1305, %v1318
        %v1320 = vcombine.high %v1312, %v1312
        %v1321 = vcombine.high %v1319, %v1319
        %v1323 = vunpack.c.l.s4 1966171168
        %v1324 = vunpack.c.0.s8 %v1323
        %v1325 = vlaneseq
        %v1326 = vshrl.u32 %v1325, 7
        %v1327 = vsub.s32 %v1324, %v1326
        %v1328 = vrot.slane %v1312, %v1327
        %v1330 = vunpack.c.l.s4 1966171168
        %v1331 = vunpack.c.0.s8 %v1330
        %v1332 = vlaneseq
        %v1333 = vshrl.u32 %v1332, 7
        %v1334 = vsub.s32 %v1331, %v1333
        %v1335 = vrot.slane %v1319, %v1334
        %v1337 = vunpack.c.l.s4 1966171168
        %v1338 = vunpack.c.0.s8 %v1337
        %v1339 = vlaneseq
        %v1340 = vshrl.u32 %v1339, 7
        %v1341 = vsub.s32 %v1338, %v1340
        %v1342 = vrot.slane %v1320, %v1341
        %v1344 = vunpack.c.l.s4 1966171168
        %v1345 = vunpack.c.0.s8 %v1344
        %v1346 = vlaneseq
        %v1347 = vshrl.u32 %v1346, 7
        %v1348 = vsub.s32 %v1345, %v1347
        %v1349 = vrot.slane %v1321, %v1348
        %v1350 = vcombine.high %v1328, %v1328
        %v1351 = vcombine.high %v1335, %v1335
        %v1352 = vcombine.high %v1342, %v1342
        %v1353 = vcombine.high %v1349, %v1349
        %1362 = vst.msk [vmem:[%s221 + $0x6] sm:$0x1] %vm494, %v1328
        %1363 = vst.msk [vmem:[%s221 + $0xe] sm:$0x1] %vm494, %v1342
        %1364 = vst.msk [vmem:[%s221 + $0x16] sm:$0x1] %vm494, %v1350
        %1365 = vst.msk [vmem:[%s221 + $0x1e] sm:$0x1] %vm494, %v1352
        %1366 = vst.msk [vmem:[%s221 + $0x26] sm:$0x1] %vm494, %v1335
        %1367 = vst.msk [vmem:[%s221 + $0x2e] sm:$0x1] %vm494, %v1349
        %1368 = vst.msk [vmem:[%s221 + $0x36] sm:$0x1] %vm494, %v1351
        %1369 = vst.msk [vmem:[%s221 + $0x3e] sm:$0x1] %vm494, %v1353
        %v1370 = vrot.slane %v321, 7
        %v1371 = vrot.slane %v326, 6
        %v1372 = vsel %vm351, %v1371, %v1370
        %v1373 = vrot.slane %v331, 5
        %v1374 = vsel %vm354, %v1373, %v1372
        %v1375 = vrot.slane %v336, 4
        %v1376 = vsel %vm357, %v1375, %v1374
        %v1377 = vsel %vm363, %v1376, 0
        %1379 = vmatprep.subr.mxu0 0.0
        %1380 = vmatpush1.msra.mxu0 0.0
        %1381 = vmatprep.subr.mxu0 0.0
        %1382 = vmatpush1.msra.mxu0 0.0
        %1383 = vmatprep.subr.mxu0 0.0
        %1384 = vmatpush1.msra.mxu0 0.0
        %1385 = vmatprep.subr.mxu0 0.0
        %1386 = vmatpush1.msra.mxu0 0.0
        %1387 = vmatprep.subr.mxu0 0.0
        %1388 = vmatpush1.msra.mxu0 0.0
        %1389 = vmatprep.subr.mxu0 0.0
        %1390 = vmatpush1.msra.mxu0 0.0
        %1391 = vmatprep.subr.mxu0 0.0
        %1392 = vmatpush1.msra.mxu0 0.0
        %1393 = vmatprep.subr.mxu0 0.0
        %1394 = vmatpush1.msra.mxu0 0.0
        %1395 = vmatprep.subr.mxu0 0.0
        %1396 = vmatpush1.msra.mxu0 0.0
        %1397 = vmatprep.subr.mxu0 0.0
        %1398 = vmatpush1.msra.mxu0 0.0
        %1399 = vmatprep.subr.mxu0 0.0
        %1400 = vmatpush1.msra.mxu0 0.0
        %1401 = vmatprep.subr.mxu0 0.0
        %1402 = vmatpush1.msra.mxu0 0.0
        %1403 = vmatprep.subr.mxu0 0.0
        %1404 = vmatpush1.msra.mxu0 0.0
        %1405 = vmatprep.subr.mxu0 0.0
        %1406 = vmatpush1.msra.mxu0 0.0
        %1407 = vmatprep.subr.mxu0 0.0
        %1408 = vmatpush1.msra.mxu0 0.0
        %1409 = vmatprep.subr.mxu0 0.0
        %1410 = vmatpush1.msra.mxu0 %v1377
        %1411 = vmatprep.subr.mxu0 0.0
        %1412 = vmatpush2.msra.mxu0 0.0
        %1413 = vmatprep.subr.mxu0 0.0
        %1414 = vmatpush2.msra.mxu0 0.0
        %1415 = vmatprep.subr.mxu0 0.0
        %1416 = vmatpush2.msra.mxu0 0.0
        %1417 = vmatprep.subr.mxu0 0.0
        %1418 = vmatpush2.msra.mxu0 0.0
        %1419 = vmatprep.subr.mxu0 0.0
        %1420 = vmatpush2.msra.mxu0 0.0
        %1421 = vmatprep.subr.mxu0 0.0
        %1422 = vmatpush2.msra.mxu0 0.0
        %1423 = vmatprep.subr.mxu0 0.0
        %1424 = vmatpush2.msra.mxu0 0.0
        %1425 = vmatprep.subr.mxu0 0.0
        %1426 = vmatpush2.msra.mxu0 0.0
        %1427 = vmatprep.subr.mxu0 0.0
        %1428 = vmatpush2.msra.mxu0 0.0
        %1429 = vmatprep.subr.mxu0 0.0
        %1430 = vmatpush2.msra.mxu0 0.0
        %1431 = vmatprep.subr.mxu0 0.0
        %1432 = vmatpush2.msra.mxu0 0.0
        %1433 = vmatprep.subr.mxu0 0.0
        %1434 = vmatpush2.msra.mxu0 0.0
        %1435 = vmatprep.subr.mxu0 0.0
        %1436 = vmatpush2.msra.mxu0 0.0
        %1437 = vmatprep.subr.mxu0 0.0
        %1438 = vmatpush2.msra.mxu0 0.0
        %1439 = vmatprep.subr.mxu0 0.0
        %1440 = vmatpush2.msra.mxu0 0.0
        %1441 = vmatprep.subr.mxu0 0.0
        %1442 = vmatpush2.msra.mxu0 0.0
        %1443 = vmatprep.mubr.f32.mxu0 0.0
        %1444 = vmatmul.mubr.f32.gmra.mxu0 %v361
        %v1445 = vpop.f32.mrf.mxu0
        %v1446 = vadd.f32 %v344, %v1445
        %v1447 = vpop.f32.mrf.mxu0
        %1448 = vdwg.mxu0
        %v1450 = vcombine.high %v1446, %v1446
        %v1452 = vunpack.c.l.s4 1966171168
        %v1453 = vunpack.c.0.s8 %v1452
        %v1454 = vlaneseq
        %v1455 = vshrl.u32 %v1454, 7
        %v1456 = vsub.s32 %v1453, %v1455
        %v1457 = vrot.slane %v1446, %v1456
        %v1459 = vunpack.c.l.s4 1966171168
        %v1460 = vunpack.c.0.s8 %v1459
        %v1461 = vlaneseq
        %v1462 = vshrl.u32 %v1461, 7
        %v1463 = vsub.s32 %v1460, %v1462
        %v1464 = vrot.slane %v1450, %v1463
        %v1465 = vcombine.high %v1457, %v1457
        %v1466 = vcombine.high %v1464, %v1464
        %v1468 = vunpack.c.l.s4 1966171168
        %v1469 = vunpack.c.0.s8 %v1468
        %v1470 = vlaneseq
        %v1471 = vshrl.u32 %v1470, 7
        %v1472 = vsub.s32 %v1469, %v1471
        %v1473 = vrot.slane %v1457, %v1472
        %v1475 = vunpack.c.l.s4 1966171168
        %v1476 = vunpack.c.0.s8 %v1475
        %v1477 = vlaneseq
        %v1478 = vshrl.u32 %v1477, 7
        %v1479 = vsub.s32 %v1476, %v1478
        %v1480 = vrot.slane %v1464, %v1479
        %v1482 = vunpack.c.l.s4 1966171168
        %v1483 = vunpack.c.0.s8 %v1482
        %v1484 = vlaneseq
        %v1485 = vshrl.u32 %v1484, 7
        %v1486 = vsub.s32 %v1483, %v1485
        %v1487 = vrot.slane %v1465, %v1486
        %v1489 = vunpack.c.l.s4 1966171168
        %v1490 = vunpack.c.0.s8 %v1489
        %v1491 = vlaneseq
        %v1492 = vshrl.u32 %v1491, 7
        %v1493 = vsub.s32 %v1490, %v1492
        %v1494 = vrot.slane %v1466, %v1493
        %v1495 = vcombine.high %v1473, %v1473
        %v1496 = vcombine.high %v1480, %v1480
        %v1497 = vcombine.high %v1487, %v1487
        %v1498 = vcombine.high %v1494, %v1494
        %1507 = vst.msk [vmem:[%s221 + $0x7] sm:$0x1] %vm494, %v1473
        %1508 = vst.msk [vmem:[%s221 + $0xf] sm:$0x1] %vm494, %v1487
        %1509 = vst.msk [vmem:[%s221 + $0x17] sm:$0x1] %vm494, %v1495
        %1510 = vst.msk [vmem:[%s221 + $0x1f] sm:$0x1] %vm494, %v1497
        %1511 = vst.msk [vmem:[%s221 + $0x27] sm:$0x1] %vm494, %v1480
        %1512 = vst.msk [vmem:[%s221 + $0x2f] sm:$0x1] %vm494, %v1494
        %1513 = vst.msk [vmem:[%s221 + $0x37] sm:$0x1] %vm494, %v1496
        %1514 = vst.msk [vmem:[%s221 + $0x3f] sm:$0x1] %vm494, %v1498
        %s1515 = sand.u32 %s140, 1
        %s1516 = scalar_lea.sflag [#allocation3], %s1515
        %s1517 = sand.u32 %s140, 1
        %s1518 = smul.addr %s1517, 64
        %s1519 = scalar_lea.vmem [#allocation2], %s1518
        // Predicated region
        $region37: #{upsample_block2d.3} parent=35 // pred_check
          %p1520 = pneg %p150
        $region38: #{upsample_block2d.3} parent=35 // pred_check_branch
          %1522 = sbr.rel (%p1520) target = $region40
        $region39: #{upsample_block2d.3} parent=35 // pred_region
          %s1523 = sadd.s32 %s24, %s25
          %s1525 = ssub.s32 1024, 1024
          %1526 = vsyncadd %s1516, %s1525
          %s1527 = smul.addr %s23, 8
          %s1528 = sadd.s32 %s1523, %s1527
          %s1529 = smul.addr %s1528, 128
          %s1530 = scalar_lea.hbm %s4, %s1529
          %s1531 = sshll.u32 %s1519, 4
          %s1532 = int_to_ptr.vmem [resolvable:$true] %s1531
          %1537 = dma.vmem_to_hbm [thread:$0]  %s1532, 1024, %s1530, %s1516, 128, 128, 8
        $region40: #{upsample_block2d.3} parent=35 // pred_fallthru
          _
      $region36: #{upsample_block2d.3} parent=5 // pred_fallthru
        _
      %p1538 = scmp.le.s32.totalorder 2, %s13
      // Predicated region
      $region41: #{upsample_block2d.3} parent=5 // pred_check
        %p1539 = pneg %p1538
      $region42: #{upsample_block2d.3} parent=5 // pred_check_branch
        %1541 = sbr.rel (%p1539) target = $region44
      $region43: #{upsample_block2d.3} parent=5 // pred_region
        %s1542 = ssub.s32 %s13, 2
        // Predicated region
        $region45: #{upsample_block2d.3} parent=43 // pred_check
          %p1543 = pneg %p156
        $region46: #{upsample_block2d.3} parent=43 // pred_check_branch
          %1545 = sbr.rel (%p1543) target = $region48
        $region47: #{upsample_block2d.3} parent=43 // pred_region
          %s1546 = sand.u32 %s141, 1
          %s1547 = scalar_lea.sflag [#allocation3], %s1546
          %s1548 = sand.u32 %s141, 1
          %s1549 = smul.addr %s1548, 64
          %s1550 = scalar_lea.vmem [#allocation2], %s1549
          %1551 = dma.done %s1547, 1024
        $region48: #{upsample_block2d.3} parent=43 // pred_fallthru
          _
      $region44: #{upsample_block2d.3} parent=5 // pred_fallthru
        _
    $region6: #{upsample_block2d.3} parent=1 // loop_footer
      %s17 = sadd.s32 1, %s13
    $region7: #{upsample_block2d.3} parent=1 // loop_footer_branch
      %12 = sbr.rel target = $region3
    $region8: #{upsample_block2d.3} parent=1 // loop_exit
      _
    %1552 = vsyncpa [#allocation3], 1
    %s1553 = scalar_lea.sflag [#allocation3], 1
    %1554 = vsyncpa %s1553, 1

</llo_original>
